<compile_context>
chip_gen: v6e
topology: v6e:2x2x1
jax: 0.10.0
libtpu: 0.0.40
codegen_flags: <defaults>
</compile_context>

<pallas_src>
import functools

import jax
import jax.numpy as jnp
from jax.experimental import pallas as pl
from jax.experimental.pallas import tpu as pltpu


def _cdiv(a, b):
    return -(-a // b)


def _round_up(x, m):
    return ((x + m - 1) // m) * m


def _default_precision():
    """HIGHEST on v6e/v7x (MXU slack hides 6-pass f32 emulation); HIGH on v5e."""
    try:
        kind = jax.devices()[0].device_kind.lower()
    except Exception:
        kind = ""
    if ("v5e" in kind) or ("v5 lite" in kind) or ("v5lite" in kind):
        return jax.lax.Precision.HIGH
    return jax.lax.Precision.HIGHEST


def _embedding_onehot_kernel(idx_ref, table_ref, out_ref, *, precision):
    """Gather one tile of embedding rows via a one-hot MXU matmul.

    idx_ref   : VMEM (1, tile_m) int32  -- lane-dense indices for this tile
    table_ref : VMEM (V, D)             -- full embedding table (resident)
    out_ref   : VMEM (tile_m, D)        -- gathered rows
    """
    v = table_ref.shape[0]
    tile_m = out_ref.shape[0]

    ids = idx_ref[...]                                            # (1, tile_m)
    rows = jax.lax.broadcasted_iota(jnp.int32, (v, tile_m), 0)    # (V, tile_m)
    # Sublane broadcast of the lane-dense ids against a sublane iota gives the
    # one-hot already transposed — no cross-lane transpose of the indices.
    one_hot_t = (rows == ids).astype(table_ref.dtype)             # (V, tile_m)

    # Contract over V (dim 0 of both operands): (tile_m, V) x (V, D) on the MXU.
    out = jax.lax.dot_general(
        one_hot_t,
        table_ref[...],
        dimension_numbers=(((0,), (0,)), ((), ())),
        preferred_element_type=jnp.float32,
        precision=precision,
    )
    out_ref[...] = out.astype(out_ref.dtype)


def item_lastfm_forward(idx, table, *, max_tile_m=4096, min_pallas_n=2048,
                        min_grid_steps=4, precision=None):
    """Pallas equivalent of item_lastfm.forward(idx) == embedding(idx)."""
    V, D = table.shape
    idx_flat = idx.reshape(-1).astype(jnp.int32)
    n = idx_flat.shape[0]
    out_shape_final = tuple(idx.shape) + (D,)

    # Tiny gathers: XLA's fused gather is strictly faster than a kernel launch
    # and keeps the op fusible with neighbors.
    if n < max(min_pallas_n, 1):
        return jnp.take(table, idx_flat, axis=0).reshape(out_shape_final)

    if precision is None:
        precision = _default_precision()

    # Tile size: as large as possible (amortize ~0.35 us/step, reach the
    # >=1 MiB/step HBM-roofline regime) but keep >= min_grid_steps steps so
    # both v7x TensorCores get work.  Multiple of 128 so the lane-dense
    # (1, tile_m) index block satisfies the (8, 128) BlockSpec constraint.
    max_tile_m = max(128, (max_tile_m // 128) * 128)
    tile_m = min(max_tile_m, _round_up(_cdiv(n, max(min_grid_steps, 1)), 128))
    tile_m = max(tile_m, 128)
    grid = (_cdiv(n, tile_m),)

    # Lane-dense index layout: one contiguous row in HBM -> one small DMA/step.
    idx2d = idx_flat.reshape(1, n)

    # VMEM budget: double-buffered output + index blocks, resident table, and
    # the one-hot / f32-emulation temporaries.  Clip to [16 MiB, 28 MiB] which
    # is valid on every generation (v7x scoped limit is 32 MiB).
    itemsize = jnp.dtype(table.dtype).itemsize
    out_blk = tile_m * D * itemsize
    idx_blk = 8 * tile_m * 4            # (1, tile_m) i32 padded to 8 sublanes
    table_blk = V * D * itemsize
    onehot_blk = tile_m * V * 4
    vmem_need = (2 * out_blk + 2 * idx_blk + 2 * table_blk
                 + 4 * onehot_blk + out_blk + (2 << 20))
    vmem_limit = int(min(max(vmem_need, 16 << 20), 28 << 20))

    cost = pl.CostEstimate(
        flops=2 * n * V * D,
        transcendentals=0,
        bytes_accessed=n * 4 + V * D * itemsize + n * D * itemsize,
    )

    out_flat = pl.pallas_call(
        functools.partial(_embedding_onehot_kernel, precision=precision),
        out_shape=jax.ShapeDtypeStruct((n, D), table.dtype),
        grid=grid,
        in_specs=[
            pl.BlockSpec((1, tile_m), lambda i: (0, i)),  # lane-dense indices
            pl.BlockSpec((V, D), lambda i: (0, 0)),       # full table, VMEM resident
        ],
        out_specs=pl.BlockSpec((tile_m, D), lambda i: (i, 0)),
        compiler_params=pltpu.CompilerParams(
            dimension_semantics=("parallel",),
            vmem_limit_bytes=vmem_limit,
        ),
        cost_estimate=cost,
    )(idx2d, table)

    return out_flat.reshape(out_shape_final)


if __name__ == "__main__":
    # Small config consistent with the module: num_lastfm_item=64, embedding_dim=128.
    num_lastfm_item = 64
    embedding_dim = 128

    key = jax.random.PRNGKey(0)
    k_w, k1, k2, k3, k4 = jax.random.split(key, 5)

    # Deterministic init matching nn.Embedding default: weight ~ N(0, 1).
    table = jax.random.normal(k_w, (num_lastfm_item, embedding_dim), dtype=jnp.float32)

    def ref_lookup(idx):
        return jnp.take(table, idx.reshape(-1), axis=0).reshape(
            idx.shape + (embedding_dim,))

    prec = _default_precision()
    tol = 1e-6 if prec == jax.lax.Precision.HIGHEST else 1e-4

    # Case 1: tiny idx (batch=2, seq=8) -> short-circuit jnp.take path (exact).
    idx_a = jax.random.randint(k1, (2, 8), 0, num_lastfm_item, jnp.int32)
    out_a = jax.block_until_ready(item_lastfm_forward(idx_a, table))
    assert out_a.shape == (2, 8, embedding_dim), out_a.shape
    assert out_a.dtype == jnp.float32
    assert jnp.allclose(out_a, ref_lookup(idx_a), rtol=1e-6, atol=1e-6)

    # Case 2: forced through the Pallas kernel, aligned n=256 -> grid of 2 steps.
    idx_b = jax.random.randint(k2, (2, 128), 0, num_lastfm_item, jnp.int32)
    out_b = jax.block_until_ready(
        item_lastfm_forward(idx_b, table, min_pallas_n=1, precision=prec))
    assert out_b.shape == (2, 128, embedding_dim), out_b.shape
    assert jnp.allclose(out_b, ref_lookup(idx_b), rtol=tol, atol=tol)

    # Case 3: forced Pallas, ragged n=255 -> masked partial last block (no pad/slice).
    idx_c = jax.random.randint(k3, (3, 85), 0, num_lastfm_item, jnp.int32)
    out_c = jax.block_until_ready(
        item_lastfm_forward(idx_c, table, min_pallas_n=1, precision=prec))
    assert out_c.shape == (3, 85, embedding_dim), out_c.shape
    assert jnp.allclose(out_c, ref_lookup(idx_c), rtol=tol, atol=tol)

    # Case 4: default path (n=2560 >= min_pallas_n) -> tile_m=640, 4 grid steps.
    idx_d = jax.random.randint(k4, (4, 640), 0, num_lastfm_item, jnp.int32)
    out_d = jax.block_until_ready(item_lastfm_forward(idx_d, table))
    assert out_d.shape == (4, 640, embedding_dim), out_d.shape
    assert jnp.allclose(out_d, ref_lookup(idx_d), rtol=tol, atol=tol)

    print("KERNEL_OK")
</pallas_src>

<mosaic_0001>
module attributes {stable_mosaic.version = 11 : i64} {
  func.func @_embedding_onehot_kernel(%arg0: i32, %arg1: memref<1x128xi32, #tpu.memory_space<vmem>>, %arg2: memref<64x128xf32, #tpu.memory_space<vmem>>, %arg3: memref<128x128xf32, #tpu.memory_space<vmem>>) attributes {dimension_semantics = [#tpu.dimension_semantics<parallel>], iteration_bounds = array<i64: 2>, scalar_prefetch = 0 : i64, scratch_operands = 0 : i64, tpu.core_type = #tpu.core_type<tc>, window_params = [{transform_indices = @transform_0, window_bounds = array<i64: 1, 128>}, {pipeline_mode = #tpu.pipeline_mode<synchronous>, transform_indices = @transform_1, window_bounds = array<i64: 64, 128>}, {transform_indices = @transform_2, window_bounds = array<i64: 128, 128>}]} {
    %c0 = arith.constant 0 : index
    %c0_0 = arith.constant 0 : index
    %0 = vector.load %arg1[%c0, %c0_0] : memref<1x128xi32, #tpu.memory_space<vmem>>, vector<1x128xi32>
    %1 = tpu.iota {dimensions = array<i32: 0>} : vector<64x128xi32>
    %2 = vector.broadcast %0 : vector<1x128xi32> to vector<64x128xi32>
    %3 = arith.cmpi eq, %1, %2 : vector<64x128xi32>
    %4 = arith.extui %3 : vector<64x128xi1> to vector<64x128xi32>
    %5 = arith.sitofp %4 : vector<64x128xi32> to vector<64x128xf32>
    %c0_1 = arith.constant 0 : index
    %c0_2 = arith.constant 0 : index
    %6 = vector.load %arg2[%c0_1, %c0_2] : memref<64x128xf32, #tpu.memory_space<vmem>>, vector<64x128xf32>
    %cst = arith.constant dense<0.000000e+00> : vector<128x128xf32>
    %7 = tpu.matmul %5, %6, %cst {dimension_numbers = #tpu.dot_dimension_numbers<[0], [0], [1], [1], [0, 1, 1, 1], [], []>, precision = #tpu.contract_precision<fp32>} : vector<64x128xf32>, vector<64x128xf32>, vector<128x128xf32> -> vector<128x128xf32>
    %c0_3 = arith.constant 0 : index
    %c0_4 = arith.constant 0 : index
    %8 = vector.load %arg3[%c0_3, %c0_4] : memref<128x128xf32, #tpu.memory_space<vmem>>, vector<128x128xf32>
    tpu.vector_store %arg3[%c0_3, %c0_4], %7 {strides = array<i32>} : memref<128x128xf32, #tpu.memory_space<vmem>>, vector<128x128xf32>,
    return
  }
  func.func @transform_0(%arg0: i32) -> (i32, i32) {
    %c0_i32 = arith.constant 0 : i32
    %c0_i32_0 = arith.constant 0 : i32
    return %c0_i32, %arg0 : i32, i32
  }
  func.func @transform_1(%arg0: i32) -> (i32, i32) {
    %c0_i32 = arith.constant 0 : i32
    %c0_i32_0 = arith.constant 0 : i32
    %c0_i32_1 = arith.constant 0 : i32
    return %c0_i32, %c0_i32_0 : i32, i32
  }
  func.func @transform_2(%arg0: i32) -> (i32, i32) {
    %c0_i32 = arith.constant 0 : i32
    %c0_i32_0 = arith.constant 0 : i32
    return %arg0, %c0_i32 : i32, i32
  }
}

</mosaic_0001>

<llo_original>
// kernel: tpu_custom_call.1
$region0: #{tpu_custom_call.1}
  #allocation0 [shape = 'u32[]', space=smem, size = 0x4, offset = 0x4, fixed_abs, tag = 'smem constant byte address 0x4 - core index']
  #allocation1 [shape = 'u32[144,128]{1,0:T(1,128)}', space=vmem, size = 0x12000, scoped, tag = 'internal scratch']
  %s0 = inlined_call_operand.hbm [shape: s32[1,256], index: 0, kind: input, shape index: {}]
  %s1 = inlined_call_operand.hbm [shape: f32[64,128], index: 1, kind: input, shape index: {}]
  %s2 = inlined_call_operand.hbm [shape: f32[256,128], index: 2, kind: output, shape index: {}]
  %s3 = sld [smem:[#allocation0]]
  $region49: #{tpu_custom_call.1} parent=0
    _
  %s5 = ssub.s32 1, %s3
  %s6 = scalar_select 0, %s5, %s3
  $region1: #{tpu_custom_call.1} parent=0
    #allocation2 [shape = 'u8[1024]{0}', space=vmem, size = 0x400, scoped, tag = 'input window, operand 0']
    #allocation3 [shape = 's32[2]{0}', space=sflag, size = 0x8, scoped, tag = 'scoped memory for tpu_custom_call.1']
    #allocation4 [shape = 's32[2]{0}', space=sflag, size = 0x8, scoped, tag = 'scoped memory for tpu_custom_call.1']
    #allocation5 [shape = 'u8[32768]{0}', space=vmem, size = 0x8000, scoped, tag = 'input window, operand 1, single buffered']
    #allocation6 [shape = 's32[1]{0}', space=sflag, size = 0x4, scoped, tag = 'scoped memory for tpu_custom_call.1']
    #allocation7 [shape = 'u8[131072]{0}', space=vmem, size = 0x20000, scoped, tag = 'output window, operand 0']
    %7 = vsyncpa [#allocation3], 0
    %s8 = scalar_lea.sflag [#allocation3], 1
    %9 = vsyncpa %s8, 0
    %10 = vsyncpa [#allocation6], 0
    %11 = vsyncpa [#allocation4], 0
    %s12 = scalar_lea.sflag [#allocation4], 1
    %13 = vsyncpa %s12, 0
    loop: start=0, step=1, limit=4
    $region2: #{tpu_custom_call.1} parent=1 // loop_pre_header
      _
    $region3: #{tpu_custom_call.1} parent=1 // loop_header
      %s15 = sphi 0, %s19
      %p16 = scmp.ge.s32.totalorder %s15, 4
      %s25 = sphi 0, %s27
      %s28 = sphi 0, %s25
      %s29 = sphi 0, %s28
      %s45 = sphi 0, %s29
      %s49 = sphi 0, %s49
      %s51 = sphi 0, %s49
      %s52 = sphi 0, %s51
      %s66 = sphi 0, %s52
      %s72 = sphi 0, %s74
      %s75 = sphi 0, %s72
      %s76 = sphi 0, %s75
      %s92 = sphi 0, %s76
    $region4: #{tpu_custom_call.1} parent=1 // loop_header_branch
      %18 = sbr.rel (%p16) target = $region8
    $region5: #{tpu_custom_call.1} parent=1 // loop_body
      %s20 = ssub.s32 %s15, 1
      %s21 = ssub.s32 %s15, 2
      %s22 = sadd.s32 %s15, 1
      %s23 = ssub.s32 %s15, %s22
      %p24 = scmp.eq.s32.totalorder %s23, 0
      %s26 = sadd.s32 %s25, 1
      %s27 = scalar_select %p24, %s25, %s26
      %p30 = pneg %p24
      %p31 = scmp.eq.s32.totalorder %s15, 1
      %p32 = por %p30, %p31
      %p33 = scmp.ne.s32.totalorder %s25, %s28
      %p34 = scmp.eq.s32.totalorder %s15, 0
      %p35 = por %p33, %p34
      %p36 = scmp.ne.s32.totalorder %s25, %s28
      %p37 = scmp.eq.s32.totalorder %s20, 1
      %p38 = por %p36, %p37
      %p39 = scmp.ne.s32.totalorder %s28, %s29
      %p40 = scmp.eq.s32.totalorder %s20, 0
      %p41 = por %p39, %p40
      %p42 = scmp.ne.s32.totalorder %s28, %s29
      %p43 = scmp.eq.s32.totalorder %s21, 1
      %p44 = por %p42, %p43
      %p46 = scmp.ne.s32.totalorder %s29, %s45
      %p47 = scmp.eq.s32.totalorder %s21, 0
      %p48 = por %p46, %p47
      %s50 = sadd.s32 %s49, 1
      %p53 = scmp.eq.s32.totalorder %s15, 1
      %p54 = scmp.ne.s32.totalorder %s49, %s51
      %p55 = scmp.eq.s32.totalorder %s15, 0
      %p56 = por %p54, %p55
      %p57 = scmp.ne.s32.totalorder %s49, %s51
      %p58 = scmp.eq.s32.totalorder %s20, 1
      %p59 = por %p57, %p58
      %p60 = scmp.ne.s32.totalorder %s51, %s52
      %p61 = scmp.eq.s32.totalorder %s20, 0
      %p62 = por %p60, %p61
      %p63 = scmp.ne.s32.totalorder %s51, %s52
      %p64 = scmp.eq.s32.totalorder %s21, 1
      %p65 = por %p63, %p64
      %p67 = scmp.ne.s32.totalorder %s52, %s66
      %p68 = scmp.eq.s32.totalorder %s21, 0
      %p69 = por %p67, %p68
      %s70 = ssub.s32 %s15, %s22
      %p71 = scmp.eq.s32.totalorder %s70, 0
      %s73 = sadd.s32 %s72, 1
      %s74 = scalar_select %p71, %s72, %s73
      %p77 = pneg %p71
      %p78 = scmp.eq.s32.totalorder %s15, 1
      %p79 = por %p77, %p78
      %p80 = scmp.ne.s32.totalorder %s72, %s75
      %p81 = scmp.eq.s32.totalorder %s15, 0
      %p82 = por %p80, %p81
      %p83 = scmp.ne.s32.totalorder %s72, %s75
      %p84 = scmp.eq.s32.totalorder %s20, 1
      %p85 = por %p83, %p84
      %p86 = scmp.ne.s32.totalorder %s75, %s76
      %p87 = scmp.eq.s32.totalorder %s20, 0
      %p88 = por %p86, %p87
      %p89 = scmp.ne.s32.totalorder %s75, %s76
      %p90 = scmp.eq.s32.totalorder %s21, 1
      %p91 = por %p89, %p90
      %p93 = scmp.ne.s32.totalorder %s76, %s92
      %p94 = scmp.eq.s32.totalorder %s21, 0
      %p95 = por %p93, %p94
      %p96 = scmp.le.s32.totalorder 1, %s15
      %p97 = scmp.lt.s32.totalorder %s15, 3
      %p98 = pnand %p96, %p97
      %p99 = pneg %p98
      // Predicated region
      $region9: #{tpu_custom_call.1} parent=5 // pred_check
        _
      $region10: #{tpu_custom_call.1} parent=5 // pred_check_branch
        %101 = sbr.rel (%p98) target = $region12
      $region11: #{tpu_custom_call.1} parent=5 // pred_region
        %s102 = ssub.s32 %s15, 1
        // Predicated region
        $region13: #{tpu_custom_call.1} parent=11 // pred_check
          %p103 = pneg %p62
        $region14: #{tpu_custom_call.1} parent=11 // pred_check_branch
          %105 = sbr.rel (%p103) target = $region16
        $region15: #{tpu_custom_call.1} parent=11 // pred_region
          %s107 = ssub.s32 1024, 1024
          %108 = vsyncadd [#allocation6], %s107
          %s109 = sshll.u32 [#allocation5], 4
          %s110 = int_to_ptr.vmem [resolvable:$true] %s109
          %115 = dma.hbm_to_vmem [thread:$0]  %s1, 1024, %s110, [#allocation6], 128, 128, 8
        $region16: #{tpu_custom_call.1} parent=11 // pred_fallthru
          _
      $region12: #{tpu_custom_call.1} parent=5 // pred_fallthru
        _
      %p116 = scmp.lt.s32.totalorder %s15, 2
      // Predicated region
      $region17: #{tpu_custom_call.1} parent=5 // pred_check
        %p117 = pneg %p116
      $region18: #{tpu_custom_call.1} parent=5 // pred_check_branch
        %119 = sbr.rel (%p117) target = $region20
      $region19: #{tpu_custom_call.1} parent=5 // pred_region
        // Predicated region
        $region21: #{tpu_custom_call.1} parent=19 // pred_check
          %p120 = pneg %p35
        $region22: #{tpu_custom_call.1} parent=19 // pred_check_branch
          %122 = sbr.rel (%p120) target = $region24
        $region23: #{tpu_custom_call.1} parent=19 // pred_region
          %s123 = sand.u32 %s25, 1
          %s124 = scalar_lea.sflag [#allocation3], %s123
          %s125 = sand.u32 %s25, 1
          %s126 = scalar_lea.vmem [#allocation2], %s125
          %s128 = ssub.s32 16, 16
          %129 = vsyncadd %s124, %s128
          %s130 = smul.addr %s15, 16
          %s131 = scalar_lea.hbm %s0, %s130
          %s133 = sshll.u32 %s126, 4
          %s134 = int_to_ptr.vmem [resolvable:$true] %s133
          %136 = dma.hbm_to_vmem [thread:$0]  %s131, 16, %s134, %s124
        $region24: #{tpu_custom_call.1} parent=19 // pred_fallthru
          _
      $region20: #{tpu_custom_call.1} parent=5 // pred_fallthru
        _
      %p137 = scmp.le.s32.totalorder 1, %s15
      %p138 = scmp.lt.s32.totalorder %s15, 3
      %p139 = pnand %p137, %p138
      %p140 = pneg %p139
      // Predicated region
      $region25: #{tpu_custom_call.1} parent=5 // pred_check
        _
      $region26: #{tpu_custom_call.1} parent=5 // pred_check_branch
        %142 = sbr.rel (%p139) target = $region28
      $region27: #{tpu_custom_call.1} parent=5 // pred_region
        %s143 = ssub.s32 %s15, 1
        %s144 = sand.u32 %s28, 1
        %s145 = scalar_lea.sflag [#allocation3], %s144
        %s146 = sand.u32 %s28, 1
        %s147 = scalar_lea.vmem [#allocation2], %s146
        // Predicated region
        $region29: #{tpu_custom_call.1} parent=27 // pred_check
          %p148 = pneg %p41
        $region30: #{tpu_custom_call.1} parent=27 // pred_check_branch
          %150 = sbr.rel (%p148) target = $region32
        $region31: #{tpu_custom_call.1} parent=27 // pred_region
          %151 = dma.done %s145, 16
        $region32: #{tpu_custom_call.1} parent=27 // pred_fallthru
          _
        // Predicated region
        $region33: #{tpu_custom_call.1} parent=27 // pred_check
          %p152 = pneg %p62
        $region34: #{tpu_custom_call.1} parent=27 // pred_check_branch
          %154 = sbr.rel (%p152) target = $region36
        $region35: #{tpu_custom_call.1} parent=27 // pred_region
          %155 = dma.done [#allocation6], 1024
        $region36: #{tpu_custom_call.1} parent=27 // pred_fallthru
          _
        %s156 = sand.u32 %s28, 1
        %s157 = scalar_lea.sflag [#allocation3], %s156
        %s158 = sand.u32 %s28, 1
        %s159 = scalar_lea.vmem [#allocation2], %s158
        %p160 = pneg %p41
        %p161 = pneg %p38
        %p162 = pneg %p62
        %p163 = pneg %p59
        %p164 = pneg %p88
        %p165 = pneg %p85
        %s166 = sand.u32 %s75, 1
        %s167 = scalar_lea.sflag [#allocation4], %s166
        %s168 = sand.u32 %s75, 1
        %s169 = smul.addr %s168, 128
        %s170 = scalar_lea.vmem [#allocation7], %s169
        %s171 = smul.u32 16, %s20
        %v172 = vld [vmem:[%s147] sm:$0x1]
        %v173 = vlaneseq
        %v174 = vshrl.u32 %v173, 7
        %v175 = vadd.s32 %v174, 8
        %v176 = vadd.s32 %v174, 16
        %v177 = vadd.s32 %v174, 24
        %v178 = vadd.s32 %v174, 32
        %v179 = vadd.s32 %v174, 40
        %v180 = vadd.s32 %v174, 48
        %v181 = vadd.s32 %v174, 56
        %v182 = vlaneseq
        %v183 = vshrl.u32 %v182, 7
        %v184 = vsub.s32 0, %v183
        %v185 = vrot.slane %v172, %v184
        %vm186 = vcmp.eq.s32.totalorder %v174, %v185
        %vm187 = vcmp.eq.s32.totalorder %v175, %v185
        %vm188 = vcmp.eq.s32.totalorder %v176, %v185
        %vm189 = vcmp.eq.s32.totalorder %v177, %v185
        %vm190 = vcmp.eq.s32.totalorder %v178, %v185
        %vm191 = vcmp.eq.s32.totalorder %v179, %v185
        %vm192 = vcmp.eq.s32.totalorder %v180, %v185
        %vm193 = vcmp.eq.s32.totalorder %v181, %v185
        %v194 = vsel %vm186, 1, 0
        %v195 = vsel %vm187, 1, 0
        %v196 = vsel %vm188, 1, 0
        %v197 = vsel %vm189, 1, 0
        %v198 = vsel %vm190, 1, 0
        %v199 = vsel %vm191, 1, 0
        %v200 = vsel %vm192, 1, 0
        %v201 = vsel %vm193, 1, 0
        %v202 = vcvt.s32.f32 %v194
        %v203 = vcvt.s32.f32 %v195
        %v204 = vcvt.s32.f32 %v196
        %v205 = vcvt.s32.f32 %v197
        %v206 = vcvt.s32.f32 %v198
        %v207 = vcvt.s32.f32 %v199
        %v208 = vcvt.s32.f32 %v200
        %v209 = vcvt.s32.f32 %v201
        %v210 = vld [vmem:[#allocation5] sm:$0xff]
        %v211 = vld [vmem:[#allocation5 + $0x8] sm:$0xff]
        %v212 = vld [vmem:[#allocation5 + $0x10] sm:$0xff]
        %v213 = vld [vmem:[#allocation5 + $0x18] sm:$0xff]
        %v214 = vld [vmem:[#allocation5 + $0x20] sm:$0xff]
        %v215 = vld [vmem:[#allocation5 + $0x28] sm:$0xff]
        %v216 = vld [vmem:[#allocation5 + $0x30] sm:$0xff]
        %v217 = vld [vmem:[#allocation5 + $0x38] sm:$0xff]
        %218 = vxpose.xlu0.b32.start [1/16] %v202, 128
        %219 = vxpose.xlu0.b32.cont [2/16] %v203, 128
        %220 = vxpose.xlu0.b32.cont [3/16] %v204, 128
        %221 = vxpose.xlu0.b32.cont [4/16] %v205, 128
        %222 = vxpose.xlu0.b32.cont [5/16] %v206, 128
        %223 = vxpose.xlu0.b32.cont [6/16] %v207, 128
        %224 = vxpose.xlu0.b32.cont [7/16] %v208, 128
        %225 = vxpose.xlu0.b32.cont [8/16] %v209, 128
        %226 = vxpose.xlu0.b32.cont [9/16] 0.0, 128
        %227 = vxpose.xlu0.b32.cont [10/16] 0.0, 128
        %228 = vxpose.xlu0.b32.cont [11/16] 0.0, 128
        %229 = vxpose.xlu0.b32.cont [12/16] 0.0, 128
        %230 = vxpose.xlu0.b32.cont [13/16] 0.0, 128
        %231 = vxpose.xlu0.b32.cont [14/16] 0.0, 128
        %232 = vxpose.xlu0.b32.cont [15/16] 0.0, 128
        %233 = vxpose.xlu0.b32.end [16/16] 0.0, 128
        %v234 = vpop.trf.xlu0
        %v235 = vpop.trf.xlu0
        %v236 = vpop.trf.xlu0
        %v237 = vpop.trf.xlu0
        %v238 = vpop.trf.xlu0
        %v239 = vpop.trf.xlu0
        %v240 = vpop.trf.xlu0
        %v241 = vpop.trf.xlu0
        %v242 = vpop.trf.xlu0
        %v243 = vpop.trf.xlu0
        %v244 = vpop.trf.xlu0
        %v245 = vpop.trf.xlu0
        %v246 = vpop.trf.xlu0
        %v247 = vpop.trf.xlu0
        %v248 = vpop.trf.xlu0
        %v249 = vpop.trf.xlu0
        %vm250 = vcmask 523264
        %v252 = vsel %vm250, %v234, 0
        %v255 = vsel %vm250, %v235, 0
        %v258 = vsel %vm250, %v236, 0
        %v261 = vsel %vm250, %v237, 0
        %v264 = vsel %vm250, %v238, 0
        %v267 = vsel %vm250, %v239, 0
        %v270 = vsel %vm250, %v240, 0
        %v273 = vsel %vm250, %v241, 0
        %v276 = vsel %vm250, %v242, 0
        %v279 = vsel %vm250, %v243, 0
        %v282 = vsel %vm250, %v244, 0
        %v285 = vsel %vm250, %v245, 0
        %v288 = vsel %vm250, %v246, 0
        %v291 = vsel %vm250, %v247, 0
        %v294 = vsel %vm250, %v248, 0
        %v297 = vsel %vm250, %v249, 0
        %299 = vmatprep.subr.mxu0 0.0
        %300 = vmatpush1.msra.mxu0 0.0
        %301 = vmatprep.subr.mxu0 0.0
        %302 = vmatpush1.msra.mxu0 0.0
        %303 = vmatprep.subr.mxu0 0.0
        %304 = vmatpush1.msra.mxu0 0.0
        %305 = vmatprep.subr.mxu0 0.0
        %306 = vmatpush1.msra.mxu0 0.0
        %307 = vmatprep.subr.mxu0 0.0
        %308 = vmatpush1.msra.mxu0 0.0
        %309 = vmatprep.subr.mxu0 0.0
        %310 = vmatpush1.msra.mxu0 0.0
        %311 = vmatprep.subr.mxu0 0.0
        %312 = vmatpush1.msra.mxu0 0.0
        %313 = vmatprep.subr.mxu0 0.0
        %314 = vmatpush1.msra.mxu0 0.0
        %315 = vmatprep.subr.mxu0 0.0
        %v316 = vand.u32 %v217, 4294901760
        %317 = vmatpush1.msra.mxu0 %v316
        %318 = vmatprep.subr.mxu0 0.0
        %v319 = vand.u32 %v216, 4294901760
        %320 = vmatpush1.msra.mxu0 %v319
        %321 = vmatprep.subr.mxu0 0.0
        %v322 = vand.u32 %v215, 4294901760
        %323 = vmatpush1.msra.mxu0 %v322
        %324 = vmatprep.subr.mxu0 0.0
        %v325 = vand.u32 %v214, 4294901760
        %326 = vmatpush1.msra.mxu0 %v325
        %327 = vmatprep.subr.mxu0 0.0
        %v328 = vand.u32 %v213, 4294901760
        %329 = vmatpush1.msra.mxu0 %v328
        %330 = vmatprep.subr.mxu0 0.0
        %v331 = vand.u32 %v212, 4294901760
        %332 = vmatpush1.msra.mxu0 %v331
        %333 = vmatprep.subr.mxu0 0.0
        %v334 = vand.u32 %v211, 4294901760
        %335 = vmatpush1.msra.mxu0 %v334
        %336 = vmatprep.subr.mxu0 0.0
        %v337 = vand.u32 %v210, 4294901760
        %338 = vmatpush1.msra.mxu0 %v337
        %339 = vmatprep.subr.mxu0 0.0
        %340 = vmatpush2.msra.mxu0 0.0
        %341 = vmatprep.subr.mxu0 0.0
        %342 = vmatpush2.msra.mxu0 0.0
        %343 = vmatprep.subr.mxu0 0.0
        %344 = vmatpush2.msra.mxu0 0.0
        %345 = vmatprep.subr.mxu0 0.0
        %346 = vmatpush2.msra.mxu0 0.0
        %347 = vmatprep.subr.mxu0 0.0
        %348 = vmatpush2.msra.mxu0 0.0
        %349 = vmatprep.subr.mxu0 0.0
        %350 = vmatpush2.msra.mxu0 0.0
        %351 = vmatprep.subr.mxu0 0.0
        %352 = vmatpush2.msra.mxu0 0.0
        %353 = vmatprep.subr.mxu0 0.0
        %354 = vmatpush2.msra.mxu0 0.0
        %355 = vmatprep.subr.mxu0 0.0
        %356 = vmatpush2.msra.mxu0 0.0
        %357 = vmatprep.subr.mxu0 0.0
        %358 = vmatpush2.msra.mxu0 0.0
        %359 = vmatprep.subr.mxu0 0.0
        %360 = vmatpush2.msra.mxu0 0.0
        %361 = vmatprep.subr.mxu0 0.0
        %362 = vmatpush2.msra.mxu0 0.0
        %363 = vmatprep.subr.mxu0 0.0
        %364 = vmatpush2.msra.mxu0 0.0
        %365 = vmatprep.subr.mxu0 0.0
        %366 = vmatpush2.msra.mxu0 0.0
        %367 = vmatprep.subr.mxu0 0.0
        %368 = vmatpush2.msra.mxu0 0.0
        %369 = vmatprep.subr.mxu0 0.0
        %370 = vmatpush2.msra.mxu0 0.0
        %371 = vmatprep.mubr.f32.mxu0 0.0
        %v372 = vand.u32 %v252, 4294901760
        %v373 = vsub.f32 %v252, %v372
        %v374 = vand.u32 %v373, 4294901760
        %v375 = vsub.f32 %v373, %v374
        %v376 = vand.u32 %v375, 4294901760
        %377 = vmatmul.mubr.f32.gmra.mxu0 %v376
        %v378 = vpop.f32.mrf.mxu0
        %v379 = vadd.f32 0.0, %v378
        %v380 = vpop.f32.mrf.mxu0
        %381 = vmatprep.mubr.f32.mxu0 0.0
        %v382 = vand.u32 %v255, 4294901760
        %v383 = vsub.f32 %v255, %v382
        %v384 = vand.u32 %v383, 4294901760
        %v385 = vsub.f32 %v383, %v384
        %v386 = vand.u32 %v385, 4294901760
        %387 = vmatmul.mubr.f32.gmra.mxu0 %v386
        %v388 = vpop.f32.mrf.mxu0
        %v389 = vadd.f32 0.0, %v388
        %v390 = vpop.f32.mrf.mxu0
        %391 = vmatprep.mubr.f32.mxu0 0.0
        %v392 = vand.u32 %v258, 4294901760
        %v393 = vsub.f32 %v258, %v392
        %v394 = vand.u32 %v393, 4294901760
        %v395 = vsub.f32 %v393, %v394
        %v396 = vand.u32 %v395, 4294901760
        %397 = vmatmul.mubr.f32.gmra.mxu0 %v396
        %v398 = vpop.f32.mrf.mxu0
        %v399 = vadd.f32 0.0, %v398
        %v400 = vpop.f32.mrf.mxu0
        %401 = vmatprep.mubr.f32.mxu0 0.0
        %v402 = vand.u32 %v261, 4294901760
        %v403 = vsub.f32 %v261, %v402
        %v404 = vand.u32 %v403, 4294901760
        %v405 = vsub.f32 %v403, %v404
        %v406 = vand.u32 %v405, 4294901760
        %407 = vmatmul.mubr.f32.gmra.mxu0 %v406
        %v408 = vpop.f32.mrf.mxu0
        %v409 = vadd.f32 0.0, %v408
        %v410 = vpop.f32.mrf.mxu0
        %411 = vmatprep.mubr.f32.mxu0 0.0
        %v412 = vand.u32 %v264, 4294901760
        %v413 = vsub.f32 %v264, %v412
        %v414 = vand.u32 %v413, 4294901760
        %v415 = vsub.f32 %v413, %v414
        %v416 = vand.u32 %v415, 4294901760
        %417 = vmatmul.mubr.f32.gmra.mxu0 %v416
        %v418 = vpop.f32.mrf.mxu0
        %v419 = vadd.f32 0.0, %v418
        %v420 = vpop.f32.mrf.mxu0
        %421 = vmatprep.mubr.f32.mxu0 0.0
        %v422 = vand.u32 %v267, 4294901760
        %v423 = vsub.f32 %v267, %v422
        %v424 = vand.u32 %v423, 4294901760
        %v425 = vsub.f32 %v423, %v424
        %v426 = vand.u32 %v425, 4294901760
        %427 = vmatmul.mubr.f32.gmra.mxu0 %v426
        %v428 = vpop.f32.mrf.mxu0
        %v429 = vadd.f32 0.0, %v428
        %v430 = vpop.f32.mrf.mxu0
        %431 = vmatprep.mubr.f32.mxu0 0.0
        %v432 = vand.u32 %v270, 4294901760
        %v433 = vsub.f32 %v270, %v432
        %v434 = vand.u32 %v433, 4294901760
        %v435 = vsub.f32 %v433, %v434
        %v436 = vand.u32 %v435, 4294901760
        %437 = vmatmul.mubr.f32.gmra.mxu0 %v436
        %v438 = vpop.f32.mrf.mxu0
        %v439 = vadd.f32 0.0, %v438
        %v440 = vpop.f32.mrf.mxu0
        %441 = vmatprep.mubr.f32.mxu0 0.0
        %v442 = vand.u32 %v273, 4294901760
        %v443 = vsub.f32 %v273, %v442
        %v444 = vand.u32 %v443, 4294901760
        %v445 = vsub.f32 %v443, %v444
        %v446 = vand.u32 %v445, 4294901760
        %447 = vmatmul.mubr.f32.gmra.mxu0 %v446
        %v448 = vpop.f32.mrf.mxu0
        %v449 = vadd.f32 0.0, %v448
        %v450 = vpop.f32.mrf.mxu0
        %451 = vmatprep.mubr.f32.mxu0 0.0
        %v452 = vand.u32 %v276, 4294901760
        %v453 = vsub.f32 %v276, %v452
        %v454 = vand.u32 %v453, 4294901760
        %v455 = vsub.f32 %v453, %v454
        %v456 = vand.u32 %v455, 4294901760
        %457 = vmatmul.mubr.f32.gmra.mxu0 %v456
        %v458 = vpop.f32.mrf.mxu0
        %v459 = vadd.f32 0.0, %v458
        %v460 = vpop.f32.mrf.mxu0
        %461 = vmatprep.mubr.f32.mxu0 0.0
        %v462 = vand.u32 %v279, 4294901760
        %v463 = vsub.f32 %v279, %v462
        %v464 = vand.u32 %v463, 4294901760
        %v465 = vsub.f32 %v463, %v464
        %v466 = vand.u32 %v465, 4294901760
        %467 = vmatmul.mubr.f32.gmra.mxu0 %v466
        %v468 = vpop.f32.mrf.mxu0
        %v469 = vadd.f32 0.0, %v468
        %v470 = vpop.f32.mrf.mxu0
        %471 = vmatprep.mubr.f32.mxu0 0.0
        %v472 = vand.u32 %v282, 4294901760
        %v473 = vsub.f32 %v282, %v472
        %v474 = vand.u32 %v473, 4294901760
        %v475 = vsub.f32 %v473, %v474
        %v476 = vand.u32 %v475, 4294901760
        %477 = vmatmul.mubr.f32.gmra.mxu0 %v476
        %v478 = vpop.f32.mrf.mxu0
        %v479 = vadd.f32 0.0, %v478
        %v480 = vpop.f32.mrf.mxu0
        %481 = vmatprep.mubr.f32.mxu0 0.0
        %v482 = vand.u32 %v285, 4294901760
        %v483 = vsub.f32 %v285, %v482
        %v484 = vand.u32 %v483, 4294901760
        %v485 = vsub.f32 %v483, %v484
        %v486 = vand.u32 %v485, 4294901760
        %487 = vmatmul.mubr.f32.gmra.mxu0 %v486
        %v488 = vpop.f32.mrf.mxu0
        %v489 = vadd.f32 0.0, %v488
        %v490 = vpop.f32.mrf.mxu0
        %491 = vmatprep.mubr.f32.mxu0 0.0
        %v492 = vand.u32 %v288, 4294901760
        %v493 = vsub.f32 %v288, %v492
        %v494 = vand.u32 %v493, 4294901760
        %v495 = vsub.f32 %v493, %v494
        %v496 = vand.u32 %v495, 4294901760
        %497 = vmatmul.mubr.f32.gmra.mxu0 %v496
        %v498 = vpop.f32.mrf.mxu0
        %v499 = vadd.f32 0.0, %v498
        %v500 = vpop.f32.mrf.mxu0
        %501 = vmatprep.mubr.f32.mxu0 0.0
        %v502 = vand.u32 %v291, 4294901760
        %v503 = vsub.f32 %v291, %v502
        %v504 = vand.u32 %v503, 4294901760
        %v505 = vsub.f32 %v503, %v504
        %v506 = vand.u32 %v505, 4294901760
        %507 = vmatmul.mubr.f32.gmra.mxu0 %v506
        %v508 = vpop.f32.mrf.mxu0
        %v509 = vadd.f32 0.0, %v508
        %v510 = vpop.f32.mrf.mxu0
        %511 = vmatprep.mubr.f32.mxu0 0.0
        %v512 = vand.u32 %v294, 4294901760
        %v513 = vsub.f32 %v294, %v512
        %v514 = vand.u32 %v513, 4294901760
        %v515 = vsub.f32 %v513, %v514
        %v516 = vand.u32 %v515, 4294901760
        %517 = vmatmul.mubr.f32.gmra.mxu0 %v516
        %v518 = vpop.f32.mrf.mxu0
        %v519 = vadd.f32 0.0, %v518
        %v520 = vpop.f32.mrf.mxu0
        %521 = vmatprep.mubr.f32.mxu0 0.0
        %v522 = vand.u32 %v297, 4294901760
        %v523 = vsub.f32 %v297, %v522
        %v524 = vand.u32 %v523, 4294901760
        %v525 = vsub.f32 %v523, %v524
        %v526 = vand.u32 %v525, 4294901760
        %527 = vmatmul.mubr.f32.gmra.mxu0 %v526
        %v528 = vpop.f32.mrf.mxu0
        %v529 = vadd.f32 0.0, %v528
        %v530 = vpop.f32.mrf.mxu0
        %531 = vdwg.mxu0
        %532 = vmatprep.subr.mxu0 0.0
        %533 = vmatpush1.msra.mxu0 0.0
        %534 = vmatprep.subr.mxu0 0.0
        %535 = vmatpush1.msra.mxu0 0.0
        %536 = vmatprep.subr.mxu0 0.0
        %537 = vmatpush1.msra.mxu0 0.0
        %538 = vmatprep.subr.mxu0 0.0
        %539 = vmatpush1.msra.mxu0 0.0
        %540 = vmatprep.subr.mxu0 0.0
        %541 = vmatpush1.msra.mxu0 0.0
        %542 = vmatprep.subr.mxu0 0.0
        %543 = vmatpush1.msra.mxu0 0.0
        %544 = vmatprep.subr.mxu0 0.0
        %545 = vmatpush1.msra.mxu0 0.0
        %546 = vmatprep.subr.mxu0 0.0
        %547 = vmatpush1.msra.mxu0 0.0
        %548 = vmatprep.subr.mxu0 0.0
        %v549 = vand.u32 %v217, 4294901760
        %v550 = vsub.f32 %v217, %v549
        %v551 = vand.u32 %v550, 4294901760
        %v552 = vsub.f32 %v550, %v551
        %v553 = vand.u32 %v552, 4294901760
        %554 = vmatpush1.msra.mxu0 %v553
        %555 = vmatprep.subr.mxu0 0.0
        %v556 = vand.u32 %v216, 4294901760
        %v557 = vsub.f32 %v216, %v556
        %v558 = vand.u32 %v557, 4294901760
        %v559 = vsub.f32 %v557, %v558
        %v560 = vand.u32 %v559, 4294901760
        %561 = vmatpush1.msra.mxu0 %v560
        %562 = vmatprep.subr.mxu0 0.0
        %v563 = vand.u32 %v215, 4294901760
        %v564 = vsub.f32 %v215, %v563
        %v565 = vand.u32 %v564, 4294901760
        %v566 = vsub.f32 %v564, %v565
        %v567 = vand.u32 %v566, 4294901760
        %568 = vmatpush1.msra.mxu0 %v567
        %569 = vmatprep.subr.mxu0 0.0
        %v570 = vand.u32 %v214, 4294901760
        %v571 = vsub.f32 %v214, %v570
        %v572 = vand.u32 %v571, 4294901760
        %v573 = vsub.f32 %v571, %v572
        %v574 = vand.u32 %v573, 4294901760
        %575 = vmatpush1.msra.mxu0 %v574
        %576 = vmatprep.subr.mxu0 0.0
        %v577 = vand.u32 %v213, 4294901760
        %v578 = vsub.f32 %v213, %v577
        %v579 = vand.u32 %v578, 4294901760
        %v580 = vsub.f32 %v578, %v579
        %v581 = vand.u32 %v580, 4294901760
        %582 = vmatpush1.msra.mxu0 %v581
        %583 = vmatprep.subr.mxu0 0.0
        %v584 = vand.u32 %v212, 4294901760
        %v585 = vsub.f32 %v212, %v584
        %v586 = vand.u32 %v585, 4294901760
        %v587 = vsub.f32 %v585, %v586
        %v588 = vand.u32 %v587, 4294901760
        %589 = vmatpush1.msra.mxu0 %v588
        %590 = vmatprep.subr.mxu0 0.0
        %v591 = vand.u32 %v211, 4294901760
        %v592 = vsub.f32 %v211, %v591
        %v593 = vand.u32 %v592, 4294901760
        %v594 = vsub.f32 %v592, %v593
        %v595 = vand.u32 %v594, 4294901760
        %596 = vmatpush1.msra.mxu0 %v595
        %597 = vmatprep.subr.mxu0 0.0
        %v598 = vand.u32 %v210, 4294901760
        %v599 = vsub.f32 %v210, %v598
        %v600 = vand.u32 %v599, 4294901760
        %v601 = vsub.f32 %v599, %v600
        %v602 = vand.u32 %v601, 4294901760
        %603 = vmatpush1.msra.mxu0 %v602
        %604 = vmatprep.subr.mxu0 0.0
        %605 = vmatpush2.msra.mxu0 0.0
        %606 = vmatprep.subr.mxu0 0.0
        %607 = vmatpush2.msra.mxu0 0.0
        %608 = vmatprep.subr.mxu0 0.0
        %609 = vmatpush2.msra.mxu0 0.0
        %610 = vmatprep.subr.mxu0 0.0
        %611 = vmatpush2.msra.mxu0 0.0
        %612 = vmatprep.subr.mxu0 0.0
        %613 = vmatpush2.msra.mxu0 0.0
        %614 = vmatprep.subr.mxu0 0.0
        %615 = vmatpush2.msra.mxu0 0.0
        %616 = vmatprep.subr.mxu0 0.0
        %617 = vmatpush2.msra.mxu0 0.0
        %618 = vmatprep.subr.mxu0 0.0
        %619 = vmatpush2.msra.mxu0 0.0
        %620 = vmatprep.subr.mxu0 0.0
        %621 = vmatpush2.msra.mxu0 0.0
        %622 = vmatprep.subr.mxu0 0.0
        %623 = vmatpush2.msra.mxu0 0.0
        %624 = vmatprep.subr.mxu0 0.0
        %625 = vmatpush2.msra.mxu0 0.0
        %626 = vmatprep.subr.mxu0 0.0
        %627 = vmatpush2.msra.mxu0 0.0
        %628 = vmatprep.subr.mxu0 0.0
        %629 = vmatpush2.msra.mxu0 0.0
        %630 = vmatprep.subr.mxu0 0.0
        %631 = vmatpush2.msra.mxu0 0.0
        %632 = vmatprep.subr.mxu0 0.0
        %633 = vmatpush2.msra.mxu0 0.0
        %634 = vmatprep.subr.mxu0 0.0
        %635 = vmatpush2.msra.mxu0 0.0
        %636 = vmatprep.mubr.f32.mxu0 0.0
        %v637 = vand.u32 %v252, 4294901760
        %638 = vmatmul.mubr.f32.gmra.mxu0 %v637
        %v639 = vpop.f32.mrf.mxu0
        %v640 = vadd.f32 %v379, %v639
        %v641 = vpop.f32.mrf.mxu0
        %642 = vmatprep.mubr.f32.mxu0 0.0
        %v643 = vand.u32 %v255, 4294901760
        %644 = vmatmul.mubr.f32.gmra.mxu0 %v643
        %v645 = vpop.f32.mrf.mxu0
        %v646 = vadd.f32 %v389, %v645
        %v647 = vpop.f32.mrf.mxu0
        %648 = vmatprep.mubr.f32.mxu0 0.0
        %v649 = vand.u32 %v258, 4294901760
        %650 = vmatmul.mubr.f32.gmra.mxu0 %v649
        %v651 = vpop.f32.mrf.mxu0
        %v652 = vadd.f32 %v399, %v651
        %v653 = vpop.f32.mrf.mxu0
        %654 = vmatprep.mubr.f32.mxu0 0.0
        %v655 = vand.u32 %v261, 4294901760
        %656 = vmatmul.mubr.f32.gmra.mxu0 %v655
        %v657 = vpop.f32.mrf.mxu0
        %v658 = vadd.f32 %v409, %v657
        %v659 = vpop.f32.mrf.mxu0
        %660 = vmatprep.mubr.f32.mxu0 0.0
        %v661 = vand.u32 %v264, 4294901760
        %662 = vmatmul.mubr.f32.gmra.mxu0 %v661
        %v663 = vpop.f32.mrf.mxu0
        %v664 = vadd.f32 %v419, %v663
        %v665 = vpop.f32.mrf.mxu0
        %666 = vmatprep.mubr.f32.mxu0 0.0
        %v667 = vand.u32 %v267, 4294901760
        %668 = vmatmul.mubr.f32.gmra.mxu0 %v667
        %v669 = vpop.f32.mrf.mxu0
        %v670 = vadd.f32 %v429, %v669
        %v671 = vpop.f32.mrf.mxu0
        %672 = vmatprep.mubr.f32.mxu0 0.0
        %v673 = vand.u32 %v270, 4294901760
        %674 = vmatmul.mubr.f32.gmra.mxu0 %v673
        %v675 = vpop.f32.mrf.mxu0
        %v676 = vadd.f32 %v439, %v675
        %v677 = vpop.f32.mrf.mxu0
        %678 = vmatprep.mubr.f32.mxu0 0.0
        %v679 = vand.u32 %v273, 4294901760
        %680 = vmatmul.mubr.f32.gmra.mxu0 %v679
        %v681 = vpop.f32.mrf.mxu0
        %v682 = vadd.f32 %v449, %v681
        %v683 = vpop.f32.mrf.mxu0
        %684 = vmatprep.mubr.f32.mxu0 0.0
        %v685 = vand.u32 %v276, 4294901760
        %686 = vmatmul.mubr.f32.gmra.mxu0 %v685
        %v687 = vpop.f32.mrf.mxu0
        %v688 = vadd.f32 %v459, %v687
        %v689 = vpop.f32.mrf.mxu0
        %690 = vmatprep.mubr.f32.mxu0 0.0
        %v691 = vand.u32 %v279, 4294901760
        %692 = vmatmul.mubr.f32.gmra.mxu0 %v691
        %v693 = vpop.f32.mrf.mxu0
        %v694 = vadd.f32 %v469, %v693
        %v695 = vpop.f32.mrf.mxu0
        %696 = vmatprep.mubr.f32.mxu0 0.0
        %v697 = vand.u32 %v282, 4294901760
        %698 = vmatmul.mubr.f32.gmra.mxu0 %v697
        %v699 = vpop.f32.mrf.mxu0
        %v700 = vadd.f32 %v479, %v699
        %v701 = vpop.f32.mrf.mxu0
        %702 = vmatprep.mubr.f32.mxu0 0.0
        %v703 = vand.u32 %v285, 4294901760
        %704 = vmatmul.mubr.f32.gmra.mxu0 %v703
        %v705 = vpop.f32.mrf.mxu0
        %v706 = vadd.f32 %v489, %v705
        %v707 = vpop.f32.mrf.mxu0
        %708 = vmatprep.mubr.f32.mxu0 0.0
        %v709 = vand.u32 %v288, 4294901760
        %710 = vmatmul.mubr.f32.gmra.mxu0 %v709
        %v711 = vpop.f32.mrf.mxu0
        %v712 = vadd.f32 %v499, %v711
        %v713 = vpop.f32.mrf.mxu0
        %714 = vmatprep.mubr.f32.mxu0 0.0
        %v715 = vand.u32 %v291, 4294901760
        %716 = vmatmul.mubr.f32.gmra.mxu0 %v715
        %v717 = vpop.f32.mrf.mxu0
        %v718 = vadd.f32 %v509, %v717
        %v719 = vpop.f32.mrf.mxu0
        %720 = vmatprep.mubr.f32.mxu0 0.0
        %v721 = vand.u32 %v294, 4294901760
        %722 = vmatmul.mubr.f32.gmra.mxu0 %v721
        %v723 = vpop.f32.mrf.mxu0
        %v724 = vadd.f32 %v519, %v723
        %v725 = vpop.f32.mrf.mxu0
        %726 = vmatprep.mubr.f32.mxu0 0.0
        %v727 = vand.u32 %v297, 4294901760
        %728 = vmatmul.mubr.f32.gmra.mxu0 %v727
        %v729 = vpop.f32.mrf.mxu0
        %v730 = vadd.f32 %v529, %v729
        %v731 = vpop.f32.mrf.mxu0
        %732 = vdwg.mxu0
        %733 = vmatprep.subr.mxu0 0.0
        %734 = vmatpush1.msra.mxu0 0.0
        %735 = vmatprep.subr.mxu0 0.0
        %736 = vmatpush1.msra.mxu0 0.0
        %737 = vmatprep.subr.mxu0 0.0
        %738 = vmatpush1.msra.mxu0 0.0
        %739 = vmatprep.subr.mxu0 0.0
        %740 = vmatpush1.msra.mxu0 0.0
        %741 = vmatprep.subr.mxu0 0.0
        %742 = vmatpush1.msra.mxu0 0.0
        %743 = vmatprep.subr.mxu0 0.0
        %744 = vmatpush1.msra.mxu0 0.0
        %745 = vmatprep.subr.mxu0 0.0
        %746 = vmatpush1.msra.mxu0 0.0
        %747 = vmatprep.subr.mxu0 0.0
        %748 = vmatpush1.msra.mxu0 0.0
        %749 = vmatprep.subr.mxu0 0.0
        %v750 = vand.u32 %v217, 4294901760
        %v751 = vsub.f32 %v217, %v750
        %752 = vmatpush1.msra.mxu0 %v751
        %753 = vmatprep.subr.mxu0 0.0
        %v754 = vand.u32 %v216, 4294901760
        %v755 = vsub.f32 %v216, %v754
        %756 = vmatpush1.msra.mxu0 %v755
        %757 = vmatprep.subr.mxu0 0.0
        %v758 = vand.u32 %v215, 4294901760
        %v759 = vsub.f32 %v215, %v758
        %760 = vmatpush1.msra.mxu0 %v759
        %761 = vmatprep.subr.mxu0 0.0
        %v762 = vand.u32 %v214, 4294901760
        %v763 = vsub.f32 %v214, %v762
        %764 = vmatpush1.msra.mxu0 %v763
        %765 = vmatprep.subr.mxu0 0.0
        %v766 = vand.u32 %v213, 4294901760
        %v767 = vsub.f32 %v213, %v766
        %768 = vmatpush1.msra.mxu0 %v767
        %769 = vmatprep.subr.mxu0 0.0
        %v770 = vand.u32 %v212, 4294901760
        %v771 = vsub.f32 %v212, %v770
        %772 = vmatpush1.msra.mxu0 %v771
        %773 = vmatprep.subr.mxu0 0.0
        %v774 = vand.u32 %v211, 4294901760
        %v775 = vsub.f32 %v211, %v774
        %776 = vmatpush1.msra.mxu0 %v775
        %777 = vmatprep.subr.mxu0 0.0
        %v778 = vand.u32 %v210, 4294901760
        %v779 = vsub.f32 %v210, %v778
        %780 = vmatpush1.msra.mxu0 %v779
        %781 = vmatprep.subr.mxu0 0.0
        %782 = vmatpush2.msra.mxu0 0.0
        %783 = vmatprep.subr.mxu0 0.0
        %784 = vmatpush2.msra.mxu0 0.0
        %785 = vmatprep.subr.mxu0 0.0
        %786 = vmatpush2.msra.mxu0 0.0
        %787 = vmatprep.subr.mxu0 0.0
        %788 = vmatpush2.msra.mxu0 0.0
        %789 = vmatprep.subr.mxu0 0.0
        %790 = vmatpush2.msra.mxu0 0.0
        %791 = vmatprep.subr.mxu0 0.0
        %792 = vmatpush2.msra.mxu0 0.0
        %793 = vmatprep.subr.mxu0 0.0
        %794 = vmatpush2.msra.mxu0 0.0
        %795 = vmatprep.subr.mxu0 0.0
        %796 = vmatpush2.msra.mxu0 0.0
        %797 = vmatprep.subr.mxu0 0.0
        %798 = vmatpush2.msra.mxu0 0.0
        %799 = vmatprep.subr.mxu0 0.0
        %800 = vmatpush2.msra.mxu0 0.0
        %801 = vmatprep.subr.mxu0 0.0
        %802 = vmatpush2.msra.mxu0 0.0
        %803 = vmatprep.subr.mxu0 0.0
        %804 = vmatpush2.msra.mxu0 0.0
        %805 = vmatprep.subr.mxu0 0.0
        %806 = vmatpush2.msra.mxu0 0.0
        %807 = vmatprep.subr.mxu0 0.0
        %808 = vmatpush2.msra.mxu0 0.0
        %809 = vmatprep.subr.mxu0 0.0
        %810 = vmatpush2.msra.mxu0 0.0
        %811 = vmatprep.subr.mxu0 0.0
        %812 = vmatpush2.msra.mxu0 0.0
        %813 = vmatprep.mubr.f32.mxu0 0.0
        %v814 = vand.u32 %v252, 4294901760
        %v815 = vsub.f32 %v252, %v814
        %816 = vmatmul.mubr.f32.gmra.mxu0 %v815
        %v817 = vpop.f32.mrf.mxu0
        %v818 = vadd.f32 %v640, %v817
        %v819 = vpop.f32.mrf.mxu0
        %820 = vmatprep.mubr.f32.mxu0 0.0
        %v821 = vand.u32 %v255, 4294901760
        %v822 = vsub.f32 %v255, %v821
        %823 = vmatmul.mubr.f32.gmra.mxu0 %v822
        %v824 = vpop.f32.mrf.mxu0
        %v825 = vadd.f32 %v646, %v824
        %v826 = vpop.f32.mrf.mxu0
        %827 = vmatprep.mubr.f32.mxu0 0.0
        %v828 = vand.u32 %v258, 4294901760
        %v829 = vsub.f32 %v258, %v828
        %830 = vmatmul.mubr.f32.gmra.mxu0 %v829
        %v831 = vpop.f32.mrf.mxu0
        %v832 = vadd.f32 %v652, %v831
        %v833 = vpop.f32.mrf.mxu0
        %834 = vmatprep.mubr.f32.mxu0 0.0
        %v835 = vand.u32 %v261, 4294901760
        %v836 = vsub.f32 %v261, %v835
        %837 = vmatmul.mubr.f32.gmra.mxu0 %v836
        %v838 = vpop.f32.mrf.mxu0
        %v839 = vadd.f32 %v658, %v838
        %v840 = vpop.f32.mrf.mxu0
        %841 = vmatprep.mubr.f32.mxu0 0.0
        %v842 = vand.u32 %v264, 4294901760
        %v843 = vsub.f32 %v264, %v842
        %844 = vmatmul.mubr.f32.gmra.mxu0 %v843
        %v845 = vpop.f32.mrf.mxu0
        %v846 = vadd.f32 %v664, %v845
        %v847 = vpop.f32.mrf.mxu0
        %848 = vmatprep.mubr.f32.mxu0 0.0
        %v849 = vand.u32 %v267, 4294901760
        %v850 = vsub.f32 %v267, %v849
        %851 = vmatmul.mubr.f32.gmra.mxu0 %v850
        %v852 = vpop.f32.mrf.mxu0
        %v853 = vadd.f32 %v670, %v852
        %v854 = vpop.f32.mrf.mxu0
        %855 = vmatprep.mubr.f32.mxu0 0.0
        %v856 = vand.u32 %v270, 4294901760
        %v857 = vsub.f32 %v270, %v856
        %858 = vmatmul.mubr.f32.gmra.mxu0 %v857
        %v859 = vpop.f32.mrf.mxu0
        %v860 = vadd.f32 %v676, %v859
        %v861 = vpop.f32.mrf.mxu0
        %862 = vmatprep.mubr.f32.mxu0 0.0
        %v863 = vand.u32 %v273, 4294901760
        %v864 = vsub.f32 %v273, %v863
        %865 = vmatmul.mubr.f32.gmra.mxu0 %v864
        %v866 = vpop.f32.mrf.mxu0
        %v867 = vadd.f32 %v682, %v866
        %v868 = vpop.f32.mrf.mxu0
        %869 = vmatprep.mubr.f32.mxu0 0.0
        %v870 = vand.u32 %v276, 4294901760
        %v871 = vsub.f32 %v276, %v870
        %872 = vmatmul.mubr.f32.gmra.mxu0 %v871
        %v873 = vpop.f32.mrf.mxu0
        %v874 = vadd.f32 %v688, %v873
        %v875 = vpop.f32.mrf.mxu0
        %876 = vmatprep.mubr.f32.mxu0 0.0
        %v877 = vand.u32 %v279, 4294901760
        %v878 = vsub.f32 %v279, %v877
        %879 = vmatmul.mubr.f32.gmra.mxu0 %v878
        %v880 = vpop.f32.mrf.mxu0
        %v881 = vadd.f32 %v694, %v880
        %v882 = vpop.f32.mrf.mxu0
        %883 = vmatprep.mubr.f32.mxu0 0.0
        %v884 = vand.u32 %v282, 4294901760
        %v885 = vsub.f32 %v282, %v884
        %886 = vmatmul.mubr.f32.gmra.mxu0 %v885
        %v887 = vpop.f32.mrf.mxu0
        %v888 = vadd.f32 %v700, %v887
        %v889 = vpop.f32.mrf.mxu0
        %890 = vmatprep.mubr.f32.mxu0 0.0
        %v891 = vand.u32 %v285, 4294901760
        %v892 = vsub.f32 %v285, %v891
        %893 = vmatmul.mubr.f32.gmra.mxu0 %v892
        %v894 = vpop.f32.mrf.mxu0
        %v895 = vadd.f32 %v706, %v894
        %v896 = vpop.f32.mrf.mxu0
        %897 = vmatprep.mubr.f32.mxu0 0.0
        %v898 = vand.u32 %v288, 4294901760
        %v899 = vsub.f32 %v288, %v898
        %900 = vmatmul.mubr.f32.gmra.mxu0 %v899
        %v901 = vpop.f32.mrf.mxu0
        %v902 = vadd.f32 %v712, %v901
        %v903 = vpop.f32.mrf.mxu0
        %904 = vmatprep.mubr.f32.mxu0 0.0
        %v905 = vand.u32 %v291, 4294901760
        %v906 = vsub.f32 %v291, %v905
        %907 = vmatmul.mubr.f32.gmra.mxu0 %v906
        %v908 = vpop.f32.mrf.mxu0
        %v909 = vadd.f32 %v718, %v908
        %v910 = vpop.f32.mrf.mxu0
        %911 = vmatprep.mubr.f32.mxu0 0.0
        %v912 = vand.u32 %v294, 4294901760
        %v913 = vsub.f32 %v294, %v912
        %914 = vmatmul.mubr.f32.gmra.mxu0 %v913
        %v915 = vpop.f32.mrf.mxu0
        %v916 = vadd.f32 %v724, %v915
        %v917 = vpop.f32.mrf.mxu0
        %918 = vmatprep.mubr.f32.mxu0 0.0
        %v919 = vand.u32 %v297, 4294901760
        %v920 = vsub.f32 %v297, %v919
        %921 = vmatmul.mubr.f32.gmra.mxu0 %v920
        %v922 = vpop.f32.mrf.mxu0
        %v923 = vadd.f32 %v730, %v922
        %v924 = vpop.f32.mrf.mxu0
        %925 = vdwg.mxu0
        %926 = vmatprep.subr.mxu0 0.0
        %927 = vmatpush1.msra.mxu0 0.0
        %928 = vmatprep.subr.mxu0 0.0
        %929 = vmatpush1.msra.mxu0 0.0
        %930 = vmatprep.subr.mxu0 0.0
        %931 = vmatpush1.msra.mxu0 0.0
        %932 = vmatprep.subr.mxu0 0.0
        %933 = vmatpush1.msra.mxu0 0.0
        %934 = vmatprep.subr.mxu0 0.0
        %935 = vmatpush1.msra.mxu0 0.0
        %936 = vmatprep.subr.mxu0 0.0
        %937 = vmatpush1.msra.mxu0 0.0
        %938 = vmatprep.subr.mxu0 0.0
        %939 = vmatpush1.msra.mxu0 0.0
        %940 = vmatprep.subr.mxu0 0.0
        %941 = vmatpush1.msra.mxu0 0.0
        %942 = vmatprep.subr.mxu0 0.0
        %v943 = vand.u32 %v217, 4294901760
        %944 = vmatpush1.msra.mxu0 %v943
        %945 = vmatprep.subr.mxu0 0.0
        %v946 = vand.u32 %v216, 4294901760
        %947 = vmatpush1.msra.mxu0 %v946
        %948 = vmatprep.subr.mxu0 0.0
        %v949 = vand.u32 %v215, 4294901760
        %950 = vmatpush1.msra.mxu0 %v949
        %951 = vmatprep.subr.mxu0 0.0
        %v952 = vand.u32 %v214, 4294901760
        %953 = vmatpush1.msra.mxu0 %v952
        %954 = vmatprep.subr.mxu0 0.0
        %v955 = vand.u32 %v213, 4294901760
        %956 = vmatpush1.msra.mxu0 %v955
        %957 = vmatprep.subr.mxu0 0.0
        %v958 = vand.u32 %v212, 4294901760
        %959 = vmatpush1.msra.mxu0 %v958
        %960 = vmatprep.subr.mxu0 0.0
        %v961 = vand.u32 %v211, 4294901760
        %962 = vmatpush1.msra.mxu0 %v961
        %963 = vmatprep.subr.mxu0 0.0
        %v964 = vand.u32 %v210, 4294901760
        %965 = vmatpush1.msra.mxu0 %v964
        %966 = vmatprep.subr.mxu0 0.0
        %967 = vmatpush2.msra.mxu0 0.0
        %968 = vmatprep.subr.mxu0 0.0
        %969 = vmatpush2.msra.mxu0 0.0
        %970 = vmatprep.subr.mxu0 0.0
        %971 = vmatpush2.msra.mxu0 0.0
        %972 = vmatprep.subr.mxu0 0.0
        %973 = vmatpush2.msra.mxu0 0.0
        %974 = vmatprep.subr.mxu0 0.0
        %975 = vmatpush2.msra.mxu0 0.0
        %976 = vmatprep.subr.mxu0 0.0
        %977 = vmatpush2.msra.mxu0 0.0
        %978 = vmatprep.subr.mxu0 0.0
        %979 = vmatpush2.msra.mxu0 0.0
        %980 = vmatprep.subr.mxu0 0.0
        %981 = vmatpush2.msra.mxu0 0.0
        %982 = vmatprep.subr.mxu0 0.0
        %983 = vmatpush2.msra.mxu0 0.0
        %984 = vmatprep.subr.mxu0 0.0
        %985 = vmatpush2.msra.mxu0 0.0
        %986 = vmatprep.subr.mxu0 0.0
        %987 = vmatpush2.msra.mxu0 0.0
        %988 = vmatprep.subr.mxu0 0.0
        %989 = vmatpush2.msra.mxu0 0.0
        %990 = vmatprep.subr.mxu0 0.0
        %991 = vmatpush2.msra.mxu0 0.0
        %992 = vmatprep.subr.mxu0 0.0
        %993 = vmatpush2.msra.mxu0 0.0
        %994 = vmatprep.subr.mxu0 0.0
        %995 = vmatpush2.msra.mxu0 0.0
        %996 = vmatprep.subr.mxu0 0.0
        %997 = vmatpush2.msra.mxu0 0.0
        %998 = vmatprep.mubr.f32.mxu0 0.0
        %v999 = vand.u32 %v252, 4294901760
        %v1000 = vsub.f32 %v252, %v999
        %v1001 = vand.u32 %v1000, 4294901760
        %1002 = vmatmul.mubr.f32.gmra.mxu0 %v1001
        %v1003 = vpop.f32.mrf.mxu0
        %v1004 = vadd.f32 %v818, %v1003
        %v1005 = vpop.f32.mrf.mxu0
        %1006 = vmatprep.mubr.f32.mxu0 0.0
        %v1007 = vand.u32 %v255, 4294901760
        %v1008 = vsub.f32 %v255, %v1007
        %v1009 = vand.u32 %v1008, 4294901760
        %1010 = vmatmul.mubr.f32.gmra.mxu0 %v1009
        %v1011 = vpop.f32.mrf.mxu0
        %v1012 = vadd.f32 %v825, %v1011
        %v1013 = vpop.f32.mrf.mxu0
        %1014 = vmatprep.mubr.f32.mxu0 0.0
        %v1015 = vand.u32 %v258, 4294901760
        %v1016 = vsub.f32 %v258, %v1015
        %v1017 = vand.u32 %v1016, 4294901760
        %1018 = vmatmul.mubr.f32.gmra.mxu0 %v1017
        %v1019 = vpop.f32.mrf.mxu0
        %v1020 = vadd.f32 %v832, %v1019
        %v1021 = vpop.f32.mrf.mxu0
        %1022 = vmatprep.mubr.f32.mxu0 0.0
        %v1023 = vand.u32 %v261, 4294901760
        %v1024 = vsub.f32 %v261, %v1023
        %v1025 = vand.u32 %v1024, 4294901760
        %1026 = vmatmul.mubr.f32.gmra.mxu0 %v1025
        %v1027 = vpop.f32.mrf.mxu0
        %v1028 = vadd.f32 %v839, %v1027
        %v1029 = vpop.f32.mrf.mxu0
        %1030 = vmatprep.mubr.f32.mxu0 0.0
        %v1031 = vand.u32 %v264, 4294901760
        %v1032 = vsub.f32 %v264, %v1031
        %v1033 = vand.u32 %v1032, 4294901760
        %1034 = vmatmul.mubr.f32.gmra.mxu0 %v1033
        %v1035 = vpop.f32.mrf.mxu0
        %v1036 = vadd.f32 %v846, %v1035
        %v1037 = vpop.f32.mrf.mxu0
        %1038 = vmatprep.mubr.f32.mxu0 0.0
        %v1039 = vand.u32 %v267, 4294901760
        %v1040 = vsub.f32 %v267, %v1039
        %v1041 = vand.u32 %v1040, 4294901760
        %1042 = vmatmul.mubr.f32.gmra.mxu0 %v1041
        %v1043 = vpop.f32.mrf.mxu0
        %v1044 = vadd.f32 %v853, %v1043
        %v1045 = vpop.f32.mrf.mxu0
        %1046 = vmatprep.mubr.f32.mxu0 0.0
        %v1047 = vand.u32 %v270, 4294901760
        %v1048 = vsub.f32 %v270, %v1047
        %v1049 = vand.u32 %v1048, 4294901760
        %1050 = vmatmul.mubr.f32.gmra.mxu0 %v1049
        %v1051 = vpop.f32.mrf.mxu0
        %v1052 = vadd.f32 %v860, %v1051
        %v1053 = vpop.f32.mrf.mxu0
        %1054 = vmatprep.mubr.f32.mxu0 0.0
        %v1055 = vand.u32 %v273, 4294901760
        %v1056 = vsub.f32 %v273, %v1055
        %v1057 = vand.u32 %v1056, 4294901760
        %1058 = vmatmul.mubr.f32.gmra.mxu0 %v1057
        %v1059 = vpop.f32.mrf.mxu0
        %v1060 = vadd.f32 %v867, %v1059
        %v1061 = vpop.f32.mrf.mxu0
        %1062 = vmatprep.mubr.f32.mxu0 0.0
        %v1063 = vand.u32 %v276, 4294901760
        %v1064 = vsub.f32 %v276, %v1063
        %v1065 = vand.u32 %v1064, 4294901760
        %1066 = vmatmul.mubr.f32.gmra.mxu0 %v1065
        %v1067 = vpop.f32.mrf.mxu0
        %v1068 = vadd.f32 %v874, %v1067
        %v1069 = vpop.f32.mrf.mxu0
        %1070 = vmatprep.mubr.f32.mxu0 0.0
        %v1071 = vand.u32 %v279, 4294901760
        %v1072 = vsub.f32 %v279, %v1071
        %v1073 = vand.u32 %v1072, 4294901760
        %1074 = vmatmul.mubr.f32.gmra.mxu0 %v1073
        %v1075 = vpop.f32.mrf.mxu0
        %v1076 = vadd.f32 %v881, %v1075
        %v1077 = vpop.f32.mrf.mxu0
        %1078 = vmatprep.mubr.f32.mxu0 0.0
        %v1079 = vand.u32 %v282, 4294901760
        %v1080 = vsub.f32 %v282, %v1079
        %v1081 = vand.u32 %v1080, 4294901760
        %1082 = vmatmul.mubr.f32.gmra.mxu0 %v1081
        %v1083 = vpop.f32.mrf.mxu0
        %v1084 = vadd.f32 %v888, %v1083
        %v1085 = vpop.f32.mrf.mxu0
        %1086 = vmatprep.mubr.f32.mxu0 0.0
        %v1087 = vand.u32 %v285, 4294901760
        %v1088 = vsub.f32 %v285, %v1087
        %v1089 = vand.u32 %v1088, 4294901760
        %1090 = vmatmul.mubr.f32.gmra.mxu0 %v1089
        %v1091 = vpop.f32.mrf.mxu0
        %v1092 = vadd.f32 %v895, %v1091
        %v1093 = vpop.f32.mrf.mxu0
        %1094 = vmatprep.mubr.f32.mxu0 0.0
        %v1095 = vand.u32 %v288, 4294901760
        %v1096 = vsub.f32 %v288, %v1095
        %v1097 = vand.u32 %v1096, 4294901760
        %1098 = vmatmul.mubr.f32.gmra.mxu0 %v1097
        %v1099 = vpop.f32.mrf.mxu0
        %v1100 = vadd.f32 %v902, %v1099
        %v1101 = vpop.f32.mrf.mxu0
        %1102 = vmatprep.mubr.f32.mxu0 0.0
        %v1103 = vand.u32 %v291, 4294901760
        %v1104 = vsub.f32 %v291, %v1103
        %v1105 = vand.u32 %v1104, 4294901760
        %1106 = vmatmul.mubr.f32.gmra.mxu0 %v1105
        %v1107 = vpop.f32.mrf.mxu0
        %v1108 = vadd.f32 %v909, %v1107
        %v1109 = vpop.f32.mrf.mxu0
        %1110 = vmatprep.mubr.f32.mxu0 0.0
        %v1111 = vand.u32 %v294, 4294901760
        %v1112 = vsub.f32 %v294, %v1111
        %v1113 = vand.u32 %v1112, 4294901760
        %1114 = vmatmul.mubr.f32.gmra.mxu0 %v1113
        %v1115 = vpop.f32.mrf.mxu0
        %v1116 = vadd.f32 %v916, %v1115
        %v1117 = vpop.f32.mrf.mxu0
        %1118 = vmatprep.mubr.f32.mxu0 0.0
        %v1119 = vand.u32 %v297, 4294901760
        %v1120 = vsub.f32 %v297, %v1119
        %v1121 = vand.u32 %v1120, 4294901760
        %1122 = vmatmul.mubr.f32.gmra.mxu0 %v1121
        %v1123 = vpop.f32.mrf.mxu0
        %v1124 = vadd.f32 %v923, %v1123
        %v1125 = vpop.f32.mrf.mxu0
        %1126 = vdwg.mxu0
        %1127 = vmatprep.subr.mxu0 0.0
        %1128 = vmatpush1.msra.mxu0 0.0
        %1129 = vmatprep.subr.mxu0 0.0
        %1130 = vmatpush1.msra.mxu0 0.0
        %1131 = vmatprep.subr.mxu0 0.0
        %1132 = vmatpush1.msra.mxu0 0.0
        %1133 = vmatprep.subr.mxu0 0.0
        %1134 = vmatpush1.msra.mxu0 0.0
        %1135 = vmatprep.subr.mxu0 0.0
        %1136 = vmatpush1.msra.mxu0 0.0
        %1137 = vmatprep.subr.mxu0 0.0
        %1138 = vmatpush1.msra.mxu0 0.0
        %1139 = vmatprep.subr.mxu0 0.0
        %1140 = vmatpush1.msra.mxu0 0.0
        %1141 = vmatprep.subr.mxu0 0.0
        %1142 = vmatpush1.msra.mxu0 0.0
        %1143 = vmatprep.subr.mxu0 0.0
        %v1144 = vand.u32 %v217, 4294901760
        %v1145 = vsub.f32 %v217, %v1144
        %v1146 = vand.u32 %v1145, 4294901760
        %1147 = vmatpush1.msra.mxu0 %v1146
        %1148 = vmatprep.subr.mxu0 0.0
        %v1149 = vand.u32 %v216, 4294901760
        %v1150 = vsub.f32 %v216, %v1149
        %v1151 = vand.u32 %v1150, 4294901760
        %1152 = vmatpush1.msra.mxu0 %v1151
        %1153 = vmatprep.subr.mxu0 0.0
        %v1154 = vand.u32 %v215, 4294901760
        %v1155 = vsub.f32 %v215, %v1154
        %v1156 = vand.u32 %v1155, 4294901760
        %1157 = vmatpush1.msra.mxu0 %v1156
        %1158 = vmatprep.subr.mxu0 0.0
        %v1159 = vand.u32 %v214, 4294901760
        %v1160 = vsub.f32 %v214, %v1159
        %v1161 = vand.u32 %v1160, 4294901760
        %1162 = vmatpush1.msra.mxu0 %v1161
        %1163 = vmatprep.subr.mxu0 0.0
        %v1164 = vand.u32 %v213, 4294901760
        %v1165 = vsub.f32 %v213, %v1164
        %v1166 = vand.u32 %v1165, 4294901760
        %1167 = vmatpush1.msra.mxu0 %v1166
        %1168 = vmatprep.subr.mxu0 0.0
        %v1169 = vand.u32 %v212, 4294901760
        %v1170 = vsub.f32 %v212, %v1169
        %v1171 = vand.u32 %v1170, 4294901760
        %1172 = vmatpush1.msra.mxu0 %v1171
        %1173 = vmatprep.subr.mxu0 0.0
        %v1174 = vand.u32 %v211, 4294901760
        %v1175 = vsub.f32 %v211, %v1174
        %v1176 = vand.u32 %v1175, 4294901760
        %1177 = vmatpush1.msra.mxu0 %v1176
        %1178 = vmatprep.subr.mxu0 0.0
        %v1179 = vand.u32 %v210, 4294901760
        %v1180 = vsub.f32 %v210, %v1179
        %v1181 = vand.u32 %v1180, 4294901760
        %1182 = vmatpush1.msra.mxu0 %v1181
        %1183 = vmatprep.subr.mxu0 0.0
        %1184 = vmatpush2.msra.mxu0 0.0
        %1185 = vmatprep.subr.mxu0 0.0
        %1186 = vmatpush2.msra.mxu0 0.0
        %1187 = vmatprep.subr.mxu0 0.0
        %1188 = vmatpush2.msra.mxu0 0.0
        %1189 = vmatprep.subr.mxu0 0.0
        %1190 = vmatpush2.msra.mxu0 0.0
        %1191 = vmatprep.subr.mxu0 0.0
        %1192 = vmatpush2.msra.mxu0 0.0
        %1193 = vmatprep.subr.mxu0 0.0
        %1194 = vmatpush2.msra.mxu0 0.0
        %1195 = vmatprep.subr.mxu0 0.0
        %1196 = vmatpush2.msra.mxu0 0.0
        %1197 = vmatprep.subr.mxu0 0.0
        %1198 = vmatpush2.msra.mxu0 0.0
        %1199 = vmatprep.subr.mxu0 0.0
        %1200 = vmatpush2.msra.mxu0 0.0
        %1201 = vmatprep.subr.mxu0 0.0
        %1202 = vmatpush2.msra.mxu0 0.0
        %1203 = vmatprep.subr.mxu0 0.0
        %1204 = vmatpush2.msra.mxu0 0.0
        %1205 = vmatprep.subr.mxu0 0.0
        %1206 = vmatpush2.msra.mxu0 0.0
        %1207 = vmatprep.subr.mxu0 0.0
        %1208 = vmatpush2.msra.mxu0 0.0
        %1209 = vmatprep.subr.mxu0 0.0
        %1210 = vmatpush2.msra.mxu0 0.0
        %1211 = vmatprep.subr.mxu0 0.0
        %1212 = vmatpush2.msra.mxu0 0.0
        %1213 = vmatprep.subr.mxu0 0.0
        %1214 = vmatpush2.msra.mxu0 0.0
        %1215 = vmatprep.mubr.f32.mxu0 0.0
        %v1216 = vand.u32 %v252, 4294901760
        %1217 = vmatmul.mubr.f32.gmra.mxu0 %v1216
        %v1218 = vpop.f32.mrf.mxu0
        %v1219 = vadd.f32 %v1004, %v1218
        %v1220 = vpop.f32.mrf.mxu0
        %1221 = vmatprep.mubr.f32.mxu0 0.0
        %v1222 = vand.u32 %v255, 4294901760
        %1223 = vmatmul.mubr.f32.gmra.mxu0 %v1222
        %v1224 = vpop.f32.mrf.mxu0
        %v1225 = vadd.f32 %v1012, %v1224
        %v1226 = vpop.f32.mrf.mxu0
        %1227 = vmatprep.mubr.f32.mxu0 0.0
        %v1228 = vand.u32 %v258, 4294901760
        %1229 = vmatmul.mubr.f32.gmra.mxu0 %v1228
        %v1230 = vpop.f32.mrf.mxu0
        %v1231 = vadd.f32 %v1020, %v1230
        %v1232 = vpop.f32.mrf.mxu0
        %1233 = vmatprep.mubr.f32.mxu0 0.0
        %v1234 = vand.u32 %v261, 4294901760
        %1235 = vmatmul.mubr.f32.gmra.mxu0 %v1234
        %v1236 = vpop.f32.mrf.mxu0
        %v1237 = vadd.f32 %v1028, %v1236
        %v1238 = vpop.f32.mrf.mxu0
        %1239 = vmatprep.mubr.f32.mxu0 0.0
        %v1240 = vand.u32 %v264, 4294901760
        %1241 = vmatmul.mubr.f32.gmra.mxu0 %v1240
        %v1242 = vpop.f32.mrf.mxu0
        %v1243 = vadd.f32 %v1036, %v1242
        %v1244 = vpop.f32.mrf.mxu0
        %1245 = vmatprep.mubr.f32.mxu0 0.0
        %v1246 = vand.u32 %v267, 4294901760
        %1247 = vmatmul.mubr.f32.gmra.mxu0 %v1246
        %v1248 = vpop.f32.mrf.mxu0
        %v1249 = vadd.f32 %v1044, %v1248
        %v1250 = vpop.f32.mrf.mxu0
        %1251 = vmatprep.mubr.f32.mxu0 0.0
        %v1252 = vand.u32 %v270, 4294901760
        %1253 = vmatmul.mubr.f32.gmra.mxu0 %v1252
        %v1254 = vpop.f32.mrf.mxu0
        %v1255 = vadd.f32 %v1052, %v1254
        %v1256 = vpop.f32.mrf.mxu0
        %1257 = vmatprep.mubr.f32.mxu0 0.0
        %v1258 = vand.u32 %v273, 4294901760
        %1259 = vmatmul.mubr.f32.gmra.mxu0 %v1258
        %v1260 = vpop.f32.mrf.mxu0
        %v1261 = vadd.f32 %v1060, %v1260
        %v1262 = vpop.f32.mrf.mxu0
        %1263 = vmatprep.mubr.f32.mxu0 0.0
        %v1264 = vand.u32 %v276, 4294901760
        %1265 = vmatmul.mubr.f32.gmra.mxu0 %v1264
        %v1266 = vpop.f32.mrf.mxu0
        %v1267 = vadd.f32 %v1068, %v1266
        %v1268 = vpop.f32.mrf.mxu0
        %1269 = vmatprep.mubr.f32.mxu0 0.0
        %v1270 = vand.u32 %v279, 4294901760
        %1271 = vmatmul.mubr.f32.gmra.mxu0 %v1270
        %v1272 = vpop.f32.mrf.mxu0
        %v1273 = vadd.f32 %v1076, %v1272
        %v1274 = vpop.f32.mrf.mxu0
        %1275 = vmatprep.mubr.f32.mxu0 0.0
        %v1276 = vand.u32 %v282, 4294901760
        %1277 = vmatmul.mubr.f32.gmra.mxu0 %v1276
        %v1278 = vpop.f32.mrf.mxu0
        %v1279 = vadd.f32 %v1084, %v1278
        %v1280 = vpop.f32.mrf.mxu0
        %1281 = vmatprep.mubr.f32.mxu0 0.0
        %v1282 = vand.u32 %v285, 4294901760
        %1283 = vmatmul.mubr.f32.gmra.mxu0 %v1282
        %v1284 = vpop.f32.mrf.mxu0
        %v1285 = vadd.f32 %v1092, %v1284
        %v1286 = vpop.f32.mrf.mxu0
        %1287 = vmatprep.mubr.f32.mxu0 0.0
        %v1288 = vand.u32 %v288, 4294901760
        %1289 = vmatmul.mubr.f32.gmra.mxu0 %v1288
        %v1290 = vpop.f32.mrf.mxu0
        %v1291 = vadd.f32 %v1100, %v1290
        %v1292 = vpop.f32.mrf.mxu0
        %1293 = vmatprep.mubr.f32.mxu0 0.0
        %v1294 = vand.u32 %v291, 4294901760
        %1295 = vmatmul.mubr.f32.gmra.mxu0 %v1294
        %v1296 = vpop.f32.mrf.mxu0
        %v1297 = vadd.f32 %v1108, %v1296
        %v1298 = vpop.f32.mrf.mxu0
        %1299 = vmatprep.mubr.f32.mxu0 0.0
        %v1300 = vand.u32 %v294, 4294901760
        %1301 = vmatmul.mubr.f32.gmra.mxu0 %v1300
        %v1302 = vpop.f32.mrf.mxu0
        %v1303 = vadd.f32 %v1116, %v1302
        %v1304 = vpop.f32.mrf.mxu0
        %1305 = vmatprep.mubr.f32.mxu0 0.0
        %v1306 = vand.u32 %v297, 4294901760
        %1307 = vmatmul.mubr.f32.gmra.mxu0 %v1306
        %v1308 = vpop.f32.mrf.mxu0
        %v1309 = vadd.f32 %v1124, %v1308
        %v1310 = vpop.f32.mrf.mxu0
        %1311 = vdwg.mxu0
        %1312 = vmatprep.subr.mxu0 0.0
        %1313 = vmatpush1.msra.mxu0 0.0
        %1314 = vmatprep.subr.mxu0 0.0
        %1315 = vmatpush1.msra.mxu0 0.0
        %1316 = vmatprep.subr.mxu0 0.0
        %1317 = vmatpush1.msra.mxu0 0.0
        %1318 = vmatprep.subr.mxu0 0.0
        %1319 = vmatpush1.msra.mxu0 0.0
        %1320 = vmatprep.subr.mxu0 0.0
        %1321 = vmatpush1.msra.mxu0 0.0
        %1322 = vmatprep.subr.mxu0 0.0
        %1323 = vmatpush1.msra.mxu0 0.0
        %1324 = vmatprep.subr.mxu0 0.0
        %1325 = vmatpush1.msra.mxu0 0.0
        %1326 = vmatprep.subr.mxu0 0.0
        %1327 = vmatpush1.msra.mxu0 0.0
        %1328 = vmatprep.subr.mxu0 0.0
        %v1329 = vand.u32 %v217, 4294901760
        %1330 = vmatpush1.msra.mxu0 %v1329
        %1331 = vmatprep.subr.mxu0 0.0
        %v1332 = vand.u32 %v216, 4294901760
        %1333 = vmatpush1.msra.mxu0 %v1332
        %1334 = vmatprep.subr.mxu0 0.0
        %v1335 = vand.u32 %v215, 4294901760
        %1336 = vmatpush1.msra.mxu0 %v1335
        %1337 = vmatprep.subr.mxu0 0.0
        %v1338 = vand.u32 %v214, 4294901760
        %1339 = vmatpush1.msra.mxu0 %v1338
        %1340 = vmatprep.subr.mxu0 0.0
        %v1341 = vand.u32 %v213, 4294901760
        %1342 = vmatpush1.msra.mxu0 %v1341
        %1343 = vmatprep.subr.mxu0 0.0
        %v1344 = vand.u32 %v212, 4294901760
        %1345 = vmatpush1.msra.mxu0 %v1344
        %1346 = vmatprep.subr.mxu0 0.0
        %v1347 = vand.u32 %v211, 4294901760
        %1348 = vmatpush1.msra.mxu0 %v1347
        %1349 = vmatprep.subr.mxu0 0.0
        %v1350 = vand.u32 %v210, 4294901760
        %1351 = vmatpush1.msra.mxu0 %v1350
        %1352 = vmatprep.subr.mxu0 0.0
        %1353 = vmatpush2.msra.mxu0 0.0
        %1354 = vmatprep.subr.mxu0 0.0
        %1355 = vmatpush2.msra.mxu0 0.0
        %1356 = vmatprep.subr.mxu0 0.0
        %1357 = vmatpush2.msra.mxu0 0.0
        %1358 = vmatprep.subr.mxu0 0.0
        %1359 = vmatpush2.msra.mxu0 0.0
        %1360 = vmatprep.subr.mxu0 0.0
        %1361 = vmatpush2.msra.mxu0 0.0
        %1362 = vmatprep.subr.mxu0 0.0
        %1363 = vmatpush2.msra.mxu0 0.0
        %1364 = vmatprep.subr.mxu0 0.0
        %1365 = vmatpush2.msra.mxu0 0.0
        %1366 = vmatprep.subr.mxu0 0.0
        %1367 = vmatpush2.msra.mxu0 0.0
        %1368 = vmatprep.subr.mxu0 0.0
        %1369 = vmatpush2.msra.mxu0 0.0
        %1370 = vmatprep.subr.mxu0 0.0
        %1371 = vmatpush2.msra.mxu0 0.0
        %1372 = vmatprep.subr.mxu0 0.0
        %1373 = vmatpush2.msra.mxu0 0.0
        %1374 = vmatprep.subr.mxu0 0.0
        %1375 = vmatpush2.msra.mxu0 0.0
        %1376 = vmatprep.subr.mxu0 0.0
        %1377 = vmatpush2.msra.mxu0 0.0
        %1378 = vmatprep.subr.mxu0 0.0
        %1379 = vmatpush2.msra.mxu0 0.0
        %1380 = vmatprep.subr.mxu0 0.0
        %1381 = vmatpush2.msra.mxu0 0.0
        %1382 = vmatprep.subr.mxu0 0.0
        %1383 = vmatpush2.msra.mxu0 0.0
        %1384 = vmatprep.mubr.f32.mxu0 0.0
        %v1385 = vand.u32 %v252, 4294901760
        %1386 = vmatmul.mubr.f32.gmra.mxu0 %v1385
        %v1387 = vpop.f32.mrf.mxu0
        %v1388 = vadd.f32 %v1219, %v1387
        %v1389 = vpop.f32.mrf.mxu0
        %1390 = vmatprep.mubr.f32.mxu0 0.0
        %v1391 = vand.u32 %v255, 4294901760
        %1392 = vmatmul.mubr.f32.gmra.mxu0 %v1391
        %v1393 = vpop.f32.mrf.mxu0
        %v1394 = vadd.f32 %v1225, %v1393
        %v1395 = vpop.f32.mrf.mxu0
        %1396 = vmatprep.mubr.f32.mxu0 0.0
        %v1397 = vand.u32 %v258, 4294901760
        %1398 = vmatmul.mubr.f32.gmra.mxu0 %v1397
        %v1399 = vpop.f32.mrf.mxu0
        %v1400 = vadd.f32 %v1231, %v1399
        %v1401 = vpop.f32.mrf.mxu0
        %1402 = vmatprep.mubr.f32.mxu0 0.0
        %v1403 = vand.u32 %v261, 4294901760
        %1404 = vmatmul.mubr.f32.gmra.mxu0 %v1403
        %v1405 = vpop.f32.mrf.mxu0
        %v1406 = vadd.f32 %v1237, %v1405
        %v1407 = vpop.f32.mrf.mxu0
        %1408 = vmatprep.mubr.f32.mxu0 0.0
        %v1409 = vand.u32 %v264, 4294901760
        %1410 = vmatmul.mubr.f32.gmra.mxu0 %v1409
        %v1411 = vpop.f32.mrf.mxu0
        %v1412 = vadd.f32 %v1243, %v1411
        %v1413 = vpop.f32.mrf.mxu0
        %1414 = vmatprep.mubr.f32.mxu0 0.0
        %v1415 = vand.u32 %v267, 4294901760
        %1416 = vmatmul.mubr.f32.gmra.mxu0 %v1415
        %v1417 = vpop.f32.mrf.mxu0
        %v1418 = vadd.f32 %v1249, %v1417
        %v1419 = vpop.f32.mrf.mxu0
        %1420 = vmatprep.mubr.f32.mxu0 0.0
        %v1421 = vand.u32 %v270, 4294901760
        %1422 = vmatmul.mubr.f32.gmra.mxu0 %v1421
        %v1423 = vpop.f32.mrf.mxu0
        %v1424 = vadd.f32 %v1255, %v1423
        %v1425 = vpop.f32.mrf.mxu0
        %1426 = vmatprep.mubr.f32.mxu0 0.0
        %v1427 = vand.u32 %v273, 4294901760
        %1428 = vmatmul.mubr.f32.gmra.mxu0 %v1427
        %v1429 = vpop.f32.mrf.mxu0
        %v1430 = vadd.f32 %v1261, %v1429
        %v1431 = vpop.f32.mrf.mxu0
        %1432 = vmatprep.mubr.f32.mxu0 0.0
        %v1433 = vand.u32 %v276, 4294901760
        %1434 = vmatmul.mubr.f32.gmra.mxu0 %v1433
        %v1435 = vpop.f32.mrf.mxu0
        %v1436 = vadd.f32 %v1267, %v1435
        %v1437 = vpop.f32.mrf.mxu0
        %1438 = vmatprep.mubr.f32.mxu0 0.0
        %v1439 = vand.u32 %v279, 4294901760
        %1440 = vmatmul.mubr.f32.gmra.mxu0 %v1439
        %v1441 = vpop.f32.mrf.mxu0
        %v1442 = vadd.f32 %v1273, %v1441
        %v1443 = vpop.f32.mrf.mxu0
        %1444 = vmatprep.mubr.f32.mxu0 0.0
        %v1445 = vand.u32 %v282, 4294901760
        %1446 = vmatmul.mubr.f32.gmra.mxu0 %v1445
        %v1447 = vpop.f32.mrf.mxu0
        %v1448 = vadd.f32 %v1279, %v1447
        %v1449 = vpop.f32.mrf.mxu0
        %1450 = vmatprep.mubr.f32.mxu0 0.0
        %v1451 = vand.u32 %v285, 4294901760
        %1452 = vmatmul.mubr.f32.gmra.mxu0 %v1451
        %v1453 = vpop.f32.mrf.mxu0
        %v1454 = vadd.f32 %v1285, %v1453
        %v1455 = vpop.f32.mrf.mxu0
        %1456 = vmatprep.mubr.f32.mxu0 0.0
        %v1457 = vand.u32 %v288, 4294901760
        %1458 = vmatmul.mubr.f32.gmra.mxu0 %v1457
        %v1459 = vpop.f32.mrf.mxu0
        %v1460 = vadd.f32 %v1291, %v1459
        %v1461 = vpop.f32.mrf.mxu0
        %1462 = vmatprep.mubr.f32.mxu0 0.0
        %v1463 = vand.u32 %v291, 4294901760
        %1464 = vmatmul.mubr.f32.gmra.mxu0 %v1463
        %v1465 = vpop.f32.mrf.mxu0
        %v1466 = vadd.f32 %v1297, %v1465
        %v1467 = vpop.f32.mrf.mxu0
        %1468 = vmatprep.mubr.f32.mxu0 0.0
        %v1469 = vand.u32 %v294, 4294901760
        %1470 = vmatmul.mubr.f32.gmra.mxu0 %v1469
        %v1471 = vpop.f32.mrf.mxu0
        %v1472 = vadd.f32 %v1303, %v1471
        %v1473 = vpop.f32.mrf.mxu0
        %1474 = vmatprep.mubr.f32.mxu0 0.0
        %v1475 = vand.u32 %v297, 4294901760
        %1476 = vmatmul.mubr.f32.gmra.mxu0 %v1475
        %v1477 = vpop.f32.mrf.mxu0
        %v1478 = vadd.f32 %v1309, %v1477
        %v1479 = vpop.f32.mrf.mxu0
        %1480 = vdwg.mxu0
        %1481 = vst [vmem:[%s170] sm:$0xff] %v1388
        %1482 = vst [vmem:[%s170 + $0x8] sm:$0xff] %v1394
        %1483 = vst [vmem:[%s170 + $0x10] sm:$0xff] %v1400
        %1484 = vst [vmem:[%s170 + $0x18] sm:$0xff] %v1406
        %1485 = vst [vmem:[%s170 + $0x20] sm:$0xff] %v1412
        %1486 = vst [vmem:[%s170 + $0x28] sm:$0xff] %v1418
        %1487 = vst [vmem:[%s170 + $0x30] sm:$0xff] %v1424
        %1488 = vst [vmem:[%s170 + $0x38] sm:$0xff] %v1430
        %1489 = vst [vmem:[%s170 + $0x40] sm:$0xff] %v1436
        %1490 = vst [vmem:[%s170 + $0x48] sm:$0xff] %v1442
        %1491 = vst [vmem:[%s170 + $0x50] sm:$0xff] %v1448
        %1492 = vst [vmem:[%s170 + $0x58] sm:$0xff] %v1454
        %1493 = vst [vmem:[%s170 + $0x60] sm:$0xff] %v1460
        %1494 = vst [vmem:[%s170 + $0x68] sm:$0xff] %v1466
        %1495 = vst [vmem:[%s170 + $0x70] sm:$0xff] %v1472
        %1496 = vst [vmem:[%s170 + $0x78] sm:$0xff] %v1478
        %s1497 = sand.u32 %s75, 1
        %s1498 = scalar_lea.sflag [#allocation4], %s1497
        %s1499 = sand.u32 %s75, 1
        %s1500 = smul.addr %s1499, 128
        %s1501 = scalar_lea.vmem [#allocation7], %s1500
        // Predicated region
        $region37: #{tpu_custom_call.1} parent=27 // pred_check
          %p1502 = pneg %p85
        $region38: #{tpu_custom_call.1} parent=27 // pred_check_branch
          %1504 = sbr.rel (%p1502) target = $region40
        $region39: #{tpu_custom_call.1} parent=27 // pred_region
          %s1505 = smul.u32 16, %s20
          %s1507 = ssub.s32 2048, 2048
          %1508 = vsyncadd %s1498, %s1507
          %s1509 = smul.addr %s1505, 128
          %s1510 = scalar_lea.hbm %s2, %s1509
          %s1511 = sshll.u32 %s1501, 4
          %s1512 = int_to_ptr.vmem [resolvable:$true] %s1511
          %1517 = dma.vmem_to_hbm [thread:$0]  %s1512, 2048, %s1510, %s1498, 128, 128, 8
        $region40: #{tpu_custom_call.1} parent=27 // pred_fallthru
          _
      $region28: #{tpu_custom_call.1} parent=5 // pred_fallthru
        _
      %p1518 = scmp.le.s32.totalorder 2, %s15
      // Predicated region
      $region41: #{tpu_custom_call.1} parent=5 // pred_check
        %p1519 = pneg %p1518
      $region42: #{tpu_custom_call.1} parent=5 // pred_check_branch
        %1521 = sbr.rel (%p1519) target = $region44
      $region43: #{tpu_custom_call.1} parent=5 // pred_region
        %s1522 = ssub.s32 %s15, 2
        // Predicated region
        $region45: #{tpu_custom_call.1} parent=43 // pred_check
          %p1523 = pneg %p91
        $region46: #{tpu_custom_call.1} parent=43 // pred_check_branch
          %1525 = sbr.rel (%p1523) target = $region48
        $region47: #{tpu_custom_call.1} parent=43 // pred_region
          %s1526 = sand.u32 %s76, 1
          %s1527 = scalar_lea.sflag [#allocation4], %s1526
          %s1528 = sand.u32 %s76, 1
          %s1529 = smul.addr %s1528, 128
          %s1530 = scalar_lea.vmem [#allocation7], %s1529
          %1531 = dma.done %s1527, 2048
        $region48: #{tpu_custom_call.1} parent=43 // pred_fallthru
          _
      $region44: #{tpu_custom_call.1} parent=5 // pred_fallthru
        _
    $region6: #{tpu_custom_call.1} parent=1 // loop_footer
      %s19 = sadd.s32 1, %s15
    $region7: #{tpu_custom_call.1} parent=1 // loop_footer_branch
      %14 = sbr.rel target = $region3
    $region8: #{tpu_custom_call.1} parent=1 // loop_exit
      _
    %1532 = vsyncpa [#allocation3], 1
    %s1533 = scalar_lea.sflag [#allocation3], 1
    %1534 = vsyncpa %s1533, 1
    %1535 = vsyncpa [#allocation6], 1
    %1536 = vsyncpa [#allocation4], 1
    %s1537 = scalar_lea.sflag [#allocation4], 1
    %1538 = vsyncpa %s1537, 1

</llo_original>
